<compile_context>
chip_gen: v7x
topology: tpu7x:2x2x1
jax: 0.10.0
libtpu: 0.0.40
codegen_flags: <defaults>
</compile_context>

<pallas_src>
import functools

import jax
import jax.numpy as jnp
from jax.experimental import pallas as pl
from jax.experimental.pallas import tpu as pltpu

HIDDEN = 512
LANE = 128
TILE_ALIGN = 256          # MXU-friendly on v6e/v7x (128 would suffice on v5e)
MAX_TILE_B = 1024


def _pick_tile_b(batch, align=TILE_ALIGN, max_tile=MAX_TILE_B):
    """Largest aligned tile such that large batches split into >=2 tiles (v7x megacore)."""
    half = (batch + 1) // 2
    tile = ((half + align - 1) // align) * align
    return max(align, min(max_tile, tile))


# ----------------------------- kernels -----------------------------

def _kernel_scalar_t(x_ref, w1x_ref, b1_ref, w2_ref, b2_ref, w3_ref, b3_ref, o_ref):
    # Layer 1 (all-ones time column already folded into b1_eff by the wrapper).
    h = jnp.dot(x_ref[...], w1x_ref[...], preferred_element_type=jnp.float32)
    h = jnp.maximum((h + b1_ref[...]).astype(jnp.bfloat16), 0)
    # Layer 2
    h = jnp.dot(h, w2_ref[...], preferred_element_type=jnp.float32)
    h = jnp.maximum((h + b2_ref[...]).astype(jnp.bfloat16), 0)
    # Layer 3 (output width padded to a lane-dense multiple of 128)
    o = jnp.dot(h, w3_ref[...], preferred_element_type=jnp.float32) + b3_ref[...]
    o_ref[...] = o.astype(o_ref.dtype)


def _kernel_with_t(x_ref, t_ref, w1x_ref, w1t_ref, b1_ref, w2_ref, b2_ref,
                   w3_ref, b3_ref, o_ref, *, t_rank1):
    # Layer 1: fused "concat" -> x @ W1[:xf] + t (*|@) W1[xf:] + b1, f32 accumulation.
    h = jnp.dot(x_ref[...], w1x_ref[...], preferred_element_type=jnp.float32)
    if t_rank1:
        # t column is [tile_b, 1]: cheap VPU broadcast instead of a degenerate K=1 matmul.
        h = h + t_ref[...].astype(jnp.float32) * w1t_ref[...].astype(jnp.float32)
    else:
        h = h + jnp.dot(t_ref[...], w1t_ref[...], preferred_element_type=jnp.float32)
    h = jnp.maximum((h + b1_ref[...]).astype(jnp.bfloat16), 0)
    # Layer 2
    h = jnp.dot(h, w2_ref[...], preferred_element_type=jnp.float32)
    h = jnp.maximum((h + b2_ref[...]).astype(jnp.bfloat16), 0)
    # Layer 3
    o = jnp.dot(h, w3_ref[...], preferred_element_type=jnp.float32) + b3_ref[...]
    o_ref[...] = o.astype(o_ref.dtype)


# ------------------------ one-time weight prep ------------------------

def prepare_params(params, t_dim=1):
    """Cast/split/pad weights once; do NOT redo this per forward call."""
    w1, b1, w2, b2, w3, b3 = params
    in_dim = w1.shape[0]
    x_feat = in_dim - t_dim
    out_dim = w3.shape[1]
    out_pad = ((out_dim + LANE - 1) // LANE) * LANE
    cdt = jnp.bfloat16

    w1t = jnp.asarray(w1[x_feat:], cdt)
    b1f = jnp.asarray(b1, jnp.float32).reshape(1, HIDDEN)
    # Scalar-t path: the t column is all ones, so its contribution is a constant row that
    # folds into the bias. Use the bf16-cast rows so numerics match the explicit-t path.
    b1_eff = b1f + jnp.sum(w1t.astype(jnp.float32), axis=0, keepdims=True)

    return dict(
        x_feat=x_feat, t_dim=t_dim, out_dim=out_dim, out_pad=out_pad,
        w1x=jnp.asarray(w1[:x_feat], cdt),
        w1t=w1t,
        b1=b1f,
        b1_eff=b1_eff,
        w2=jnp.asarray(w2, cdt),
        b2=jnp.asarray(b2, jnp.float32).reshape(1, HIDDEN),
        w3p=jnp.zeros((HIDDEN, out_pad), cdt).at[:, :out_dim].set(jnp.asarray(w3, cdt)),
        b3p=jnp.zeros((1, out_pad), jnp.float32).at[:, :out_dim].set(
            jnp.asarray(b3, jnp.float32).reshape(-1)),
    )


# ----------------------------- forwards -----------------------------

def _weight_specs(x_feat, out_pad, with_t, t_dim):
    specs = [pl.BlockSpec((x_feat, HIDDEN), lambda i: (0, 0))]          # W1[:x_feat] (resident)
    if with_t:
        specs.append(pl.BlockSpec((t_dim, HIDDEN), lambda i: (0, 0)))   # W1[x_feat:] (resident)
    specs += [
        pl.BlockSpec((1, HIDDEN), lambda i: (0, 0)),                    # b1 / b1_eff
        pl.BlockSpec((HIDDEN, HIDDEN), lambda i: (0, 0)),               # W2          (resident)
        pl.BlockSpec((1, HIDDEN), lambda i: (0, 0)),                    # b2
        pl.BlockSpec((HIDDEN, out_pad), lambda i: (0, 0)),              # W3 (padded) (resident)
        pl.BlockSpec((1, out_pad), lambda i: (0, 0)),                   # b3 (padded)
    ]
    return specs


def _cost(b_pad, x_feat, t_cols, out_pad, in_bytes, weights):
    wbytes = sum(int(w.size) * w.dtype.itemsize for w in weights)
    return pl.CostEstimate(
        flops=2 * b_pad * ((x_feat + t_cols) * HIDDEN + HIDDEN * HIDDEN + HIDDEN * out_pad),
        transcendentals=0,
        bytes_accessed=int(in_bytes) + wbytes + b_pad * out_pad * 2,
    )


@functools.partial(jax.jit, static_argnames=("tile_b", "out_dim"))
def _forward_scalar_t(x, w1x, b1eff, w2, b2, w3p, b3p, *, tile_b, out_dim):
    B, x_feat = x.shape
    out_pad = w3p.shape[1]
    x_c = x.astype(jnp.bfloat16)

    n_tiles = pl.cdiv(B, tile_b)
    b_pad = n_tiles * tile_b
    if b_pad != B:
        x_c = jnp.pad(x_c, ((0, b_pad - B), (0, 0)))

    out = pl.pallas_call(
        _kernel_scalar_t,
        out_shape=jax.ShapeDtypeStruct((b_pad, out_pad), jnp.bfloat16),
        grid_spec=pltpu.PrefetchScalarGridSpec(
            num_scalar_prefetch=0,
            grid=(n_tiles,),
            in_specs=[pl.BlockSpec((tile_b, x_feat), lambda i: (i, 0))]
                     + _weight_specs(x_feat, out_pad, with_t=False, t_dim=0),
            out_specs=pl.BlockSpec((tile_b, out_pad), lambda i: (i, 0)),
        ),
        compiler_params=pltpu.CompilerParams(dimension_semantics=("parallel",)),
        cost_estimate=_cost(b_pad, x_feat, 0, out_pad,
                            x_c.size * x_c.dtype.itemsize,
                            (w1x, b1eff, w2, b2, w3p, b3p)),
    )(x_c, w1x, b1eff, w2, b2, w3p, b3p)

    return out[:B, :out_dim].astype(x.dtype)


@functools.partial(jax.jit, static_argnames=("tile_b", "out_dim"))
def _forward_with_t(x, t_col, w1x, w1t, b1, w2, b2, w3p, b3p, *, tile_b, out_dim):
    B, x_feat = x.shape
    t_dim = t_col.shape[-1]
    out_pad = w3p.shape[1]
    x_c = x.astype(jnp.bfloat16)
    t_c = t_col.astype(jnp.bfloat16)

    n_tiles = pl.cdiv(B, tile_b)
    b_pad = n_tiles * tile_b
    if b_pad != B:
        x_c = jnp.pad(x_c, ((0, b_pad - B), (0, 0)))
        t_c = jnp.pad(t_c, ((0, b_pad - B), (0, 0)))

    kernel = functools.partial(_kernel_with_t, t_rank1=(t_dim == 1))

    out = pl.pallas_call(
        kernel,
        out_shape=jax.ShapeDtypeStruct((b_pad, out_pad), jnp.bfloat16),
        grid_spec=pltpu.PrefetchScalarGridSpec(
            num_scalar_prefetch=0,
            grid=(n_tiles,),
            in_specs=[pl.BlockSpec((tile_b, x_feat), lambda i: (i, 0)),
                      pl.BlockSpec((tile_b, t_dim), lambda i: (i, 0))]
                     + _weight_specs(x_feat, out_pad, with_t=True, t_dim=t_dim),
            out_specs=pl.BlockSpec((tile_b, out_pad), lambda i: (i, 0)),
        ),
        compiler_params=pltpu.CompilerParams(dimension_semantics=("parallel",)),
        cost_estimate=_cost(b_pad, x_feat, t_dim, out_pad,
                            (x_c.size + t_c.size) * 2,
                            (w1x, w1t, b1, w2, b2, w3p, b3p)),
    )(x_c, t_c, w1x, w1t, b1, w2, b2, w3p, b3p)

    return out[:B, :out_dim].astype(x.dtype)


def net_forward(x, t, prep, tile_b=None):
    """Reproduces Net.forward semantics for x: [..., x_feat], t scalar or array."""
    x = jnp.asarray(x)
    lead = x.shape[:-1]
    x2d = x.reshape(-1, x.shape[-1])
    assert x2d.shape[-1] == prep["x_feat"], (x2d.shape, prep["x_feat"])
    B = x2d.shape[0]
    tb = tile_b if tile_b is not None else _pick_tile_b(B)

    t_is_scalar = isinstance(t, (int, float)) or jnp.asarray(t).ndim < 2
    if t_is_scalar:
        # torch: t = torch.ones_like(x[...,0:1] * t) -> all-ones column; folded into b1_eff.
        out = _forward_scalar_t(x2d, prep["w1x"], prep["b1_eff"], prep["w2"], prep["b2"],
                                prep["w3p"], prep["b3p"], tile_b=tb, out_dim=prep["out_dim"])
    else:
        t_arr = jnp.asarray(t, x.dtype)
        t2d = t_arr.reshape(-1, t_arr.shape[-1])
        assert t2d.shape == (B, prep["t_dim"]), (t2d.shape, B, prep["t_dim"])
        out = _forward_with_t(x2d, t2d, prep["w1x"], prep["w1t"], prep["b1"], prep["w2"],
                              prep["b2"], prep["w3p"], prep["b3p"],
                              tile_b=tb, out_dim=prep["out_dim"])
    return out.reshape(*lead, out.shape[-1])


# ----------------------------- init / reference -----------------------------

def init_params(key, in_dim, out_dim=1, dtype=jnp.float32):
    """Deterministic PyTorch-Linear-style uniform init (fan_in based)."""
    ks = jax.random.split(key, 6)

    def linear(kw, kb, fan_in, fan_out):
        bound = 1.0 / jnp.sqrt(fan_in)
        w = jax.random.uniform(kw, (fan_in, fan_out), dtype, -bound, bound)
        b = jax.random.uniform(kb, (1, fan_out), dtype, -bound, bound)
        return w, b

    w1, b1 = linear(ks[0], ks[1], in_dim, HIDDEN)
    w2, b2 = linear(ks[2], ks[3], HIDDEN, HIDDEN)
    w3, b3 = linear(ks[4], ks[5], HIDDEN, out_dim)
    return (w1, b1, w2, b2, w3, b3)


def _reference_forward(x, t, params):
    """Pure-JAX reference using the same bf16-weight/activation, f32-accumulate numerics."""
    w1, b1, w2, b2, w3, b3 = params
    t_arr = jnp.asarray(t, dtype=x.dtype)
    if t_arr.ndim < 2:
        t_col = jnp.ones_like(x[..., 0:1] * t_arr)
    else:
        t_col = t_arr.astype(x.dtype)
    xc = jnp.concatenate([x, t_col], axis=-1).astype(jnp.bfloat16)
    w1b, w2b, w3b = (w.astype(jnp.bfloat16) for w in (w1, w2, w3))
    h = jnp.dot(xc, w1b, preferred_element_type=jnp.float32) + b1.reshape(1, -1)
    h = jnp.maximum(h.astype(jnp.bfloat16), 0)
    h = jnp.dot(h, w2b, preferred_element_type=jnp.float32) + b2.reshape(1, -1)
    h = jnp.maximum(h.astype(jnp.bfloat16), 0)
    o = jnp.dot(h, w3b, preferred_element_type=jnp.float32) + b3.reshape(1, -1)
    return o.astype(x.dtype)


if __name__ == "__main__":
    key = jax.random.PRNGKey(0)
    k_x, k_t, k_p = jax.random.split(key, 3)

    batch = 8
    x_feat = 7            # x features; in_dim = x_feat + 1 (time channel appended)
    in_dim = x_feat + 1
    out_dim = 1

    x = jax.random.normal(k_x, (batch, x_feat), dtype=jnp.float32)
    t_scalar = 0.37       # scalar time -> all-ones column (torch quirk), folded into b1_eff
    t_mat = jax.random.uniform(k_t, (batch, 1), dtype=jnp.float32)   # explicit 2-D t path

    params = init_params(k_p, in_dim, out_dim)
    prep = prepare_params(params, t_dim=1)   # one-time: cast/split/pad weights, fold b1_eff

    out1 = jax.block_until_ready(net_forward(x, t_scalar, prep))
    out2 = jax.block_until_ready(net_forward(x, t_mat, prep))

    ref1 = _reference_forward(x, t_scalar, params)
    ref2 = _reference_forward(x, t_mat, params)

    assert out1.shape == (batch, out_dim), out1.shape
    assert out1.dtype == x.dtype, out1.dtype
    assert out2.shape == (batch, out_dim), out2.shape
    assert jnp.allclose(out1, ref1, atol=1e-2, rtol=1e-2), "scalar-t mismatch vs reference"
    assert jnp.allclose(out2, ref2, atol=1e-2, rtol=1e-2), "matrix-t mismatch vs reference"

    print("KERNEL_OK")
</pallas_src>

<mosaic_0001>
module attributes {stable_mosaic.version = 11 : i64} {
  func.func @_kernel_scalar_t(%arg0: i32, %arg1: memref<256x7xbf16, #tpu.memory_space<vmem>>, %arg2: memref<7x512xbf16, #tpu.memory_space<vmem>>, %arg3: memref<1x512xf32, #tpu.memory_space<vmem>>, %arg4: memref<512x512xbf16, #tpu.memory_space<vmem>>, %arg5: memref<1x512xf32, #tpu.memory_space<vmem>>, %arg6: memref<512x128xbf16, #tpu.memory_space<vmem>>, %arg7: memref<1x128xf32, #tpu.memory_space<vmem>>, %arg8: memref<256x128xbf16, #tpu.memory_space<vmem>>) attributes {dimension_semantics = [#tpu.dimension_semantics<parallel>], iteration_bounds = array<i64: 1>, scalar_prefetch = 0 : i64, scratch_operands = 0 : i64, tpu.core_type = #tpu.core_type<tc>, window_params = [{transform_indices = @transform_0, window_bounds = array<i64: 256, 7>}, {pipeline_mode = #tpu.pipeline_mode<synchronous>, transform_indices = @transform_1, window_bounds = array<i64: 7, 512>}, {pipeline_mode = #tpu.pipeline_mode<synchronous>, transform_indices = @transform_2, window_bounds = array<i64: 1, 512>}, {pipeline_mode = #tpu.pipeline_mode<synchronous>, transform_indices = @transform_3, window_bounds = array<i64: 512, 512>}, {pipeline_mode = #tpu.pipeline_mode<synchronous>, transform_indices = @transform_4, window_bounds = array<i64: 1, 512>}, {pipeline_mode = #tpu.pipeline_mode<synchronous>, transform_indices = @transform_5, window_bounds = array<i64: 512, 128>}, {pipeline_mode = #tpu.pipeline_mode<synchronous>, transform_indices = @transform_6, window_bounds = array<i64: 1, 128>}, {transform_indices = @transform_7, window_bounds = array<i64: 256, 128>}]} {
    %c0 = arith.constant 0 : index
    %c0_0 = arith.constant 0 : index
    %0 = vector.load %arg1[%c0, %c0_0] : memref<256x7xbf16, #tpu.memory_space<vmem>>, vector<256x7xbf16>
    %c0_1 = arith.constant 0 : index
    %c0_2 = arith.constant 0 : index
    %1 = vector.load %arg2[%c0_1, %c0_2] : memref<7x512xbf16, #tpu.memory_space<vmem>>, vector<7x512xbf16>
    %cst = arith.constant dense<0.000000e+00> : vector<256x512xf32>
    %2 = tpu.matmul %0, %1, %cst {dimension_numbers = #tpu.dot_dimension_numbers<[1], [0], [0], [1], [0, 0, 1, 1], [], []>} : vector<256x7xbf16>, vector<7x512xbf16>, vector<256x512xf32> -> vector<256x512xf32>
    %c0_3 = arith.constant 0 : index
    %c0_4 = arith.constant 0 : index
    %3 = vector.load %arg3[%c0_3, %c0_4] : memref<1x512xf32, #tpu.memory_space<vmem>>, vector<1x512xf32>
    %4 = vector.broadcast %3 : vector<1x512xf32> to vector<256x512xf32>
    %5 = arith.addf %2, %4 : vector<256x512xf32>
    %6 = arith.truncf %5 : vector<256x512xf32> to vector<256x512xbf16>
    %cst_5 = arith.constant 0.000000e+00 : bf16
    %7 = vector.broadcast %cst_5 : bf16 to vector<256x512xbf16>
    %8 = arith.maximumf %6, %7 : vector<256x512xbf16>
    %c0_6 = arith.constant 0 : index
    %c0_7 = arith.constant 0 : index
    %9 = vector.load %arg4[%c0_6, %c0_7] : memref<512x512xbf16, #tpu.memory_space<vmem>>, vector<512x512xbf16>
    %cst_8 = arith.constant dense<0.000000e+00> : vector<256x512xf32>
    %10 = tpu.matmul %8, %9, %cst_8 {dimension_numbers = #tpu.dot_dimension_numbers<[1], [0], [0], [1], [0, 0, 1, 1], [], []>} : vector<256x512xbf16>, vector<512x512xbf16>, vector<256x512xf32> -> vector<256x512xf32>
    %c0_9 = arith.constant 0 : index
    %c0_10 = arith.constant 0 : index
    %11 = vector.load %arg5[%c0_9, %c0_10] : memref<1x512xf32, #tpu.memory_space<vmem>>, vector<1x512xf32>
    %12 = vector.broadcast %11 : vector<1x512xf32> to vector<256x512xf32>
    %13 = arith.addf %10, %12 : vector<256x512xf32>
    %14 = arith.truncf %13 : vector<256x512xf32> to vector<256x512xbf16>
    %cst_11 = arith.constant 0.000000e+00 : bf16
    %15 = vector.broadcast %cst_11 : bf16 to vector<256x512xbf16>
    %16 = arith.maximumf %14, %15 : vector<256x512xbf16>
    %c0_12 = arith.constant 0 : index
    %c0_13 = arith.constant 0 : index
    %17 = vector.load %arg6[%c0_12, %c0_13] : memref<512x128xbf16, #tpu.memory_space<vmem>>, vector<512x128xbf16>
    %cst_14 = arith.constant dense<0.000000e+00> : vector<256x128xf32>
    %18 = tpu.matmul %16, %17, %cst_14 {dimension_numbers = #tpu.dot_dimension_numbers<[1], [0], [0], [1], [0, 0, 1, 1], [], []>} : vector<256x512xbf16>, vector<512x128xbf16>, vector<256x128xf32> -> vector<256x128xf32>
    %c0_15 = arith.constant 0 : index
    %c0_16 = arith.constant 0 : index
    %19 = vector.load %arg7[%c0_15, %c0_16] : memref<1x128xf32, #tpu.memory_space<vmem>>, vector<1x128xf32>
    %20 = vector.broadcast %19 : vector<1x128xf32> to vector<256x128xf32>
    %21 = arith.addf %18, %20 : vector<256x128xf32>
    %22 = arith.truncf %21 : vector<256x128xf32> to vector<256x128xbf16>
    %c0_17 = arith.constant 0 : index
    %c0_18 = arith.constant 0 : index
    %23 = vector.load %arg8[%c0_17, %c0_18] : memref<256x128xbf16, #tpu.memory_space<vmem>>, vector<256x128xbf16>
    tpu.vector_store %arg8[%c0_17, %c0_18], %22 {strides = array<i32>} : memref<256x128xbf16, #tpu.memory_space<vmem>>, vector<256x128xbf16>,
    return
  }
  func.func @transform_0(%arg0: i32) -> (i32, i32) {
    %c0_i32 = arith.constant 0 : i32
    %c0_i32_0 = arith.constant 0 : i32
    return %arg0, %c0_i32 : i32, i32
  }
  func.func @transform_1(%arg0: i32) -> (i32, i32) {
    %c0_i32 = arith.constant 0 : i32
    %c0_i32_0 = arith.constant 0 : i32
    %c0_i32_1 = arith.constant 0 : i32
    return %c0_i32, %c0_i32_0 : i32, i32
  }
  func.func @transform_2(%arg0: i32) -> (i32, i32) {
    %c0_i32 = arith.constant 0 : i32
    %c0_i32_0 = arith.constant 0 : i32
    %c0_i32_1 = arith.constant 0 : i32
    return %c0_i32, %c0_i32_0 : i32, i32
  }
  func.func @transform_3(%arg0: i32) -> (i32, i32) {
    %c0_i32 = arith.constant 0 : i32
    %c0_i32_0 = arith.constant 0 : i32
    %c0_i32_1 = arith.constant 0 : i32
    return %c0_i32, %c0_i32_0 : i32, i32
  }
  func.func @transform_4(%arg0: i32) -> (i32, i32) {
    %c0_i32 = arith.constant 0 : i32
    %c0_i32_0 = arith.constant 0 : i32
    %c0_i32_1 = arith.constant 0 : i32
    return %c0_i32, %c0_i32_0 : i32, i32
  }
  func.func @transform_5(%arg0: i32) -> (i32, i32) {
    %c0_i32 = arith.constant 0 : i32
    %c0_i32_0 = arith.constant 0 : i32
    %c0_i32_1 = arith.constant 0 : i32
    return %c0_i32, %c0_i32_0 : i32, i32
  }
  func.func @transform_6(%arg0: i32) -> (i32, i32) {
    %c0_i32 = arith.constant 0 : i32
    %c0_i32_0 = arith.constant 0 : i32
    %c0_i32_1 = arith.constant 0 : i32
    return %c0_i32, %c0_i32_0 : i32, i32
  }
  func.func @transform_7(%arg0: i32) -> (i32, i32) {
    %c0_i32 = arith.constant 0 : i32
    %c0_i32_0 = arith.constant 0 : i32
    return %arg0, %c0_i32 : i32, i32
  }
}

</mosaic_0001>

<llo_original>
// kernel: _forward_scalar_t.1
$region0: #{_forward_scalar_t.1}
  #allocation0 [shape = 'u32[]', space=smem, size = 0x4, offset = 0x4, fixed_abs, tag = 'smem constant byte address 0x4 - core index']
  #allocation1 [shape = 'u32[144,128]{1,0:T(1,128)}', space=vmem, size = 0x12000, scoped, tag = 'internal scratch']
  %s0 = inlined_call_operand.vmem [shape: bf16[256,7], index: 0, kind: input, shape index: {}]
  %s1 = inlined_call_operand.vmem [shape: bf16[7,512], index: 1, kind: input, shape index: {}]
  %s2 = inlined_call_operand.vmem [shape: f32[1,512], index: 2, kind: input, shape index: {}]
  %s3 = inlined_call_operand.hbm [shape: bf16[512,512], index: 3, kind: input, shape index: {}]
  %s4 = inlined_call_operand.vmem [shape: f32[1,512], index: 4, kind: input, shape index: {}]
  %s5 = inlined_call_operand.hbm [shape: bf16[512,128], index: 5, kind: input, shape index: {}]
  %s6 = inlined_call_operand.vmem [shape: f32[1,128], index: 6, kind: input, shape index: {}]
  %s7 = inlined_call_operand.vmem [shape: bf16[256,128], index: 7, kind: output, shape index: {}]
  %s8 = sld [smem:[#allocation0]]
  $region46: #{_forward_scalar_t.1} parent=0
    _
  %s10 = ssub.s32 1, %s8
  %s11 = scalar_select 0, %s10, %s8
  $region1: #{_forward_scalar_t.1} parent=0
    #allocation2 [shape = 'u8[524288]{0}', space=vmem, size = 0x80000, scoped, tag = 'input window, operand 3, single buffered']
    #allocation3 [shape = 's32[1]{0}', space=sflag, size = 0x4, scoped, tag = 'scoped memory for _forward_scalar_t.1']
    #allocation4 [shape = 'u8[131072]{0}', space=vmem, size = 0x20000, scoped, tag = 'input window, operand 5, single buffered']
    #allocation5 [shape = 's32[1]{0}', space=sflag, size = 0x4, scoped, tag = 'scoped memory for _forward_scalar_t.1']
    %12 = vsyncpa [#allocation3], 0
    %13 = vsyncpa [#allocation5], 0
    // Predicated region
    $region2: #{_forward_scalar_t.1} parent=1 // pred_check
      _
    $region3: #{_forward_scalar_t.1} parent=1 // pred_check_branch
      %15 = sbr.rel (0) target = $region5
    $region4: #{_forward_scalar_t.1} parent=1 // pred_region
      _
    $region5: #{_forward_scalar_t.1} parent=1 // pred_fallthru
      _
    // Predicated region
    $region6: #{_forward_scalar_t.1} parent=1 // pred_check
      _
    $region7: #{_forward_scalar_t.1} parent=1 // pred_check_branch
      %17 = sbr.rel (0) target = $region9
    $region8: #{_forward_scalar_t.1} parent=1 // pred_region
      _
    $region9: #{_forward_scalar_t.1} parent=1 // pred_fallthru
      _
    // Predicated region
    $region10: #{_forward_scalar_t.1} parent=1 // pred_check
      _
    $region11: #{_forward_scalar_t.1} parent=1 // pred_check_branch
      %19 = sbr.rel (0) target = $region13
    $region12: #{_forward_scalar_t.1} parent=1 // pred_region
      _
    $region13: #{_forward_scalar_t.1} parent=1 // pred_fallthru
      _
    // Predicated region
    $region14: #{_forward_scalar_t.1} parent=1 // pred_check
      _
    $region15: #{_forward_scalar_t.1} parent=1 // pred_check_branch
      %21 = sbr.rel (0) target = $region17
    $region16: #{_forward_scalar_t.1} parent=1 // pred_region
      %s23 = ssub.s32 16384, 16384
      %24 = vsyncadd [#allocation3], %s23
      %s25 = sshll.u32 [#allocation2], 4
      %s26 = int_to_ptr.vmem [resolvable:$true] %s25
      %31 = dma.hbm_to_vmem [thread:$0]  %s3, 16384, %s26, [#allocation3], 256, 256, 16
    $region17: #{_forward_scalar_t.1} parent=1 // pred_fallthru
      _
    // Predicated region
    $region18: #{_forward_scalar_t.1} parent=1 // pred_check
      _
    $region19: #{_forward_scalar_t.1} parent=1 // pred_check_branch
      %33 = sbr.rel (0) target = $region21
    $region20: #{_forward_scalar_t.1} parent=1 // pred_region
      _
    $region21: #{_forward_scalar_t.1} parent=1 // pred_fallthru
      _
    // Predicated region
    $region22: #{_forward_scalar_t.1} parent=1 // pred_check
      _
    $region23: #{_forward_scalar_t.1} parent=1 // pred_check_branch
      %35 = sbr.rel (0) target = $region25
    $region24: #{_forward_scalar_t.1} parent=1 // pred_region
      %s37 = ssub.s32 4096, 4096
      %38 = vsyncadd [#allocation5], %s37
      %s39 = sshll.u32 [#allocation4], 4
      %s40 = int_to_ptr.vmem [resolvable:$true] %s39
      %45 = dma.hbm_to_vmem [thread:$0]  %s5, 4096, %s40, [#allocation5], 64, 64, 4
    $region25: #{_forward_scalar_t.1} parent=1 // pred_fallthru
      _
    // Predicated region
    $region26: #{_forward_scalar_t.1} parent=1 // pred_check
      _
    $region27: #{_forward_scalar_t.1} parent=1 // pred_check_branch
      %47 = sbr.rel (0) target = $region29
    $region28: #{_forward_scalar_t.1} parent=1 // pred_region
      _
    $region29: #{_forward_scalar_t.1} parent=1 // pred_fallthru
      _
    // Predicated region
    $region30: #{_forward_scalar_t.1} parent=1 // pred_check
      _
    $region31: #{_forward_scalar_t.1} parent=1 // pred_check_branch
      %49 = sbr.rel (0) target = $region33
    $region32: #{_forward_scalar_t.1} parent=1 // pred_region
      %50 = dma.done [#allocation3], 16384
    $region33: #{_forward_scalar_t.1} parent=1 // pred_fallthru
      _
    // Predicated region
    $region34: #{_forward_scalar_t.1} parent=1 // pred_check
      _
    $region35: #{_forward_scalar_t.1} parent=1 // pred_check_branch
      %52 = sbr.rel (0) target = $region37
    $region36: #{_forward_scalar_t.1} parent=1 // pred_region
      %53 = dma.done [#allocation5], 4096
    $region37: #{_forward_scalar_t.1} parent=1 // pred_fallthru
      _
    %v55 = vld [vmem:[%s0] sm:$0xf]
    %v56 = vld [vmem:[%s0 + $0x4] sm:$0xf]
    %v57 = vld [vmem:[%s0 + $0x8] sm:$0xf]
    %v58 = vld [vmem:[%s0 + $0xc] sm:$0xf]
    %v59 = vld [vmem:[%s0 + $0x10] sm:$0xf]
    %v60 = vld [vmem:[%s0 + $0x14] sm:$0xf]
    %v61 = vld [vmem:[%s0 + $0x18] sm:$0xf]
    %v62 = vld [vmem:[%s0 + $0x1c] sm:$0xf]
    %v63 = vld [vmem:[%s0 + $0x20] sm:$0xf]
    %v64 = vld [vmem:[%s0 + $0x24] sm:$0xf]
    %v65 = vld [vmem:[%s0 + $0x28] sm:$0xf]
    %v66 = vld [vmem:[%s0 + $0x2c] sm:$0xf]
    %v67 = vld [vmem:[%s0 + $0x30] sm:$0xf]
    %v68 = vld [vmem:[%s0 + $0x34] sm:$0xf]
    %v69 = vld [vmem:[%s0 + $0x38] sm:$0xf]
    %v70 = vld [vmem:[%s0 + $0x3c] sm:$0xf]
    %v71 = vld [vmem:[%s0 + $0x40] sm:$0xf]
    %v72 = vld [vmem:[%s0 + $0x44] sm:$0xf]
    %v73 = vld [vmem:[%s0 + $0x48] sm:$0xf]
    %v74 = vld [vmem:[%s0 + $0x4c] sm:$0xf]
    %v75 = vld [vmem:[%s0 + $0x50] sm:$0xf]
    %v76 = vld [vmem:[%s0 + $0x54] sm:$0xf]
    %v77 = vld [vmem:[%s0 + $0x58] sm:$0xf]
    %v78 = vld [vmem:[%s0 + $0x5c] sm:$0xf]
    %v79 = vld [vmem:[%s0 + $0x60] sm:$0xf]
    %v80 = vld [vmem:[%s0 + $0x64] sm:$0xf]
    %v81 = vld [vmem:[%s0 + $0x68] sm:$0xf]
    %v82 = vld [vmem:[%s0 + $0x6c] sm:$0xf]
    %v83 = vld [vmem:[%s0 + $0x70] sm:$0xf]
    %v84 = vld [vmem:[%s0 + $0x74] sm:$0xf]
    %v85 = vld [vmem:[%s0 + $0x78] sm:$0xf]
    %v86 = vld [vmem:[%s0 + $0x7c] sm:$0xf]
    %v87 = vld [vmem:[%s1] sm:$0xff]
    %v88 = vld [vmem:[%s1 + $0x8] sm:$0xff]
    %v89 = vld [vmem:[%s2] sm:$0xf]
    %v91 = vlaneseq
    %v92 = vshrl.u32 %v91, 7
    %v93 = vsub.s32 0, %v92
    %v94 = vrot.slane %v89, %v93
    %v95 = vlaneseq
    %v96 = vshrl.u32 %v95, 7
    %v97 = vsub.s32 1, %v96
    %v98 = vrot.slane %v89, %v97
    %v99 = vlaneseq
    %v100 = vshrl.u32 %v99, 7
    %v101 = vsub.s32 2, %v100
    %v102 = vrot.slane %v89, %v101
    %v103 = vlaneseq
    %v104 = vshrl.u32 %v103, 7
    %v105 = vsub.s32 3, %v104
    %v106 = vrot.slane %v89, %v105
    %v143 = vunpack.c.l.b16 %v55
    %v144 = vunpack.c.l.b16 %v56
    %v145 = vunpack.c.l.b16 %v57
    %v146 = vunpack.c.l.b16 %v58
    %v147 = vunpack.c.l.b16 %v59
    %v148 = vunpack.c.l.b16 %v60
    %v149 = vunpack.c.l.b16 %v61
    %v150 = vunpack.c.l.b16 %v62
    %v151 = vunpack.c.l.b16 %v63
    %v152 = vunpack.c.l.b16 %v64
    %v153 = vunpack.c.l.b16 %v65
    %v154 = vunpack.c.l.b16 %v66
    %v155 = vunpack.c.l.b16 %v67
    %v156 = vunpack.c.l.b16 %v68
    %v157 = vunpack.c.l.b16 %v69
    %v158 = vunpack.c.l.b16 %v70
    %v159 = vunpack.c.l.b16 %v71
    %v160 = vunpack.c.l.b16 %v72
    %v161 = vunpack.c.l.b16 %v73
    %v162 = vunpack.c.l.b16 %v74
    %v163 = vunpack.c.l.b16 %v75
    %v164 = vunpack.c.l.b16 %v76
    %v165 = vunpack.c.l.b16 %v77
    %v166 = vunpack.c.l.b16 %v78
    %v167 = vunpack.c.l.b16 %v79
    %v168 = vunpack.c.l.b16 %v80
    %v169 = vunpack.c.l.b16 %v81
    %v170 = vunpack.c.l.b16 %v82
    %v171 = vunpack.c.l.b16 %v83
    %v172 = vunpack.c.l.b16 %v84
    %v173 = vunpack.c.l.b16 %v85
    %v174 = vunpack.c.l.b16 %v86
    %v175 = vpack.c.b16 %v144, %v143
    %v176 = vpack.c.b16 %v146, %v145
    %v177 = vpack.c.b16 %v148, %v147
    %v178 = vpack.c.b16 %v150, %v149
    %v179 = vpack.c.b16 %v152, %v151
    %v180 = vpack.c.b16 %v154, %v153
    %v181 = vpack.c.b16 %v156, %v155
    %v182 = vpack.c.b16 %v158, %v157
    %v183 = vpack.c.b16 %v160, %v159
    %v184 = vpack.c.b16 %v162, %v161
    %v185 = vpack.c.b16 %v164, %v163
    %v186 = vpack.c.b16 %v166, %v165
    %v187 = vpack.c.b16 %v168, %v167
    %v188 = vpack.c.b16 %v170, %v169
    %v189 = vpack.c.b16 %v172, %v171
    %v190 = vpack.c.b16 %v174, %v173
    %v193 = vunpack.c.l.b16 %v87
    %v194 = vunpack.c.h.b16 %v87
    %v195 = vunpack.c.l.b16 %v88
    %v196 = vunpack.c.h.b16 %v88
    %v197 = vpack.c.b16 %v193, %v193
    %v198 = vpack.c.b16 %v194, %v194
    %v199 = vpack.c.b16 %v195, %v195
    %v200 = vpack.c.b16 %v196, %v196
    %vm201 = vcmask 56320
    %v203 = vsel %vm201, %v175, 0
    %v206 = vsel %vm201, %v176, 0
    %v209 = vsel %vm201, %v177, 0
    %v212 = vsel %vm201, %v178, 0
    %v215 = vsel %vm201, %v179, 0
    %v218 = vsel %vm201, %v180, 0
    %v221 = vsel %vm201, %v181, 0
    %v224 = vsel %vm201, %v182, 0
    %v227 = vsel %vm201, %v183, 0
    %v230 = vsel %vm201, %v184, 0
    %v233 = vsel %vm201, %v185, 0
    %v236 = vsel %vm201, %v186, 0
    %v239 = vsel %vm201, %v187, 0
    %v242 = vsel %vm201, %v188, 0
    %v245 = vsel %vm201, %v189, 0
    %v248 = vsel %vm201, %v190, 0
    %vm250 = vcmask 1042432
    %vm251 = vcmask 1043456
    %v252 = vsel %vm250, 4294967295, 65535
    %v253 = vsel %vm251, %v252, 0
    %v255 = vand.u32 %v197, %v253
    %v258 = vand.u32 %v198, %v253
    %v261 = vand.u32 %v199, %v253
    %v264 = vand.u32 %v200, %v253
    %266 = vmatprep.subr.bf16.mxu0 %v258
    %267 = vmatpush1.bf16.msra.mxu0 %v255
    %268 = vmatprep.subr.bf16.mxu0 0
    %269 = vmatpush1.bf16.msra.mxu0 0
    %270 = vmatprep.subr.bf16.mxu0 0
    %271 = vmatpush1.bf16.msra.mxu0 0
    %272 = vmatprep.subr.bf16.mxu0 0
    %273 = vmatpush1.bf16.msra.mxu0 0
    %274 = vmatprep.subr.bf16.mxu0 0
    %275 = vmatpush1.bf16.msra.mxu0 0
    %276 = vmatprep.subr.bf16.mxu0 0
    %277 = vmatpush1.bf16.msra.mxu0 0
    %278 = vmatprep.subr.bf16.mxu0 0
    %279 = vmatpush1.bf16.msra.mxu0 0
    %280 = vmatprep.subr.bf16.mxu0 0
    %281 = vmatpush1.bf16.msra.mxu0 0
    %282 = vmatprep.subr.bf16.mxu0 0
    %283 = vmatpush1.bf16.msra.mxu0 0
    %284 = vmatprep.subr.bf16.mxu0 0
    %285 = vmatpush1.bf16.msra.mxu0 0
    %286 = vmatprep.subr.bf16.mxu0 0
    %287 = vmatpush1.bf16.msra.mxu0 0
    %288 = vmatprep.subr.bf16.mxu0 0
    %289 = vmatpush1.bf16.msra.mxu0 0
    %290 = vmatprep.subr.bf16.mxu0 0
    %291 = vmatpush1.bf16.msra.mxu0 0
    %292 = vmatprep.subr.bf16.mxu0 0
    %293 = vmatpush1.bf16.msra.mxu0 0
    %294 = vmatprep.subr.bf16.mxu0 0
    %295 = vmatpush1.bf16.msra.mxu0 0
    %296 = vmatprep.subr.bf16.mxu0 0
    %297 = vmatpush1.bf16.msra.mxu0 0
    %298 = vmatprep.mubr.bf16.mxu0 0
    %299 = vmatmul.mubr.bf16.gmra.mrb[0].mxu0 %v203
    %v300 = vpop.f32.mrb[0].mxu0
    %v301 = vadd.f32 %v94, %v300
    %v302 = vpop.f32.mrb[0].mxu0
    %v303 = vadd.f32 %v98, %v302
    %v304 = vpop.f32.mrb[0].mxu0
    %v305 = vadd.f32 %v94, %v304
    %v306 = vpop.f32.mrb[0].mxu0
    %v307 = vadd.f32 %v98, %v306
    %308 = vmatprep.mubr.bf16.mxu0 0
    %309 = vmatmul.mubr.bf16.gmra.mrb[0].mxu0 %v206
    %v310 = vpop.f32.mrb[0].mxu0
    %v311 = vadd.f32 %v94, %v310
    %v312 = vpop.f32.mrb[0].mxu0
    %v313 = vadd.f32 %v98, %v312
    %v314 = vpop.f32.mrb[0].mxu0
    %v315 = vadd.f32 %v94, %v314
    %v316 = vpop.f32.mrb[0].mxu0
    %v317 = vadd.f32 %v98, %v316
    %318 = vmatprep.mubr.bf16.mxu0 0
    %319 = vmatmul.mubr.bf16.gmra.mrb[0].mxu0 %v209
    %v320 = vpop.f32.mrb[0].mxu0
    %v321 = vadd.f32 %v94, %v320
    %v322 = vpop.f32.mrb[0].mxu0
    %v323 = vadd.f32 %v98, %v322
    %v324 = vpop.f32.mrb[0].mxu0
    %v325 = vadd.f32 %v94, %v324
    %v326 = vpop.f32.mrb[0].mxu0
    %v327 = vadd.f32 %v98, %v326
    %328 = vmatprep.mubr.bf16.mxu0 0
    %329 = vmatmul.mubr.bf16.gmra.mrb[0].mxu0 %v212
    %v330 = vpop.f32.mrb[0].mxu0
    %v331 = vadd.f32 %v94, %v330
    %v332 = vpop.f32.mrb[0].mxu0
    %v333 = vadd.f32 %v98, %v332
    %v334 = vpop.f32.mrb[0].mxu0
    %v335 = vadd.f32 %v94, %v334
    %v336 = vpop.f32.mrb[0].mxu0
    %v337 = vadd.f32 %v98, %v336
    %338 = vmatprep.mubr.bf16.mxu0 0
    %339 = vmatmul.mubr.bf16.gmra.mrb[0].mxu0 %v215
    %v340 = vpop.f32.mrb[0].mxu0
    %v341 = vadd.f32 %v94, %v340
    %v342 = vpop.f32.mrb[0].mxu0
    %v343 = vadd.f32 %v98, %v342
    %v344 = vpop.f32.mrb[0].mxu0
    %v345 = vadd.f32 %v94, %v344
    %v346 = vpop.f32.mrb[0].mxu0
    %v347 = vadd.f32 %v98, %v346
    %348 = vmatprep.mubr.bf16.mxu0 0
    %349 = vmatmul.mubr.bf16.gmra.mrb[0].mxu0 %v218
    %v350 = vpop.f32.mrb[0].mxu0
    %v351 = vadd.f32 %v94, %v350
    %v352 = vpop.f32.mrb[0].mxu0
    %v353 = vadd.f32 %v98, %v352
    %v354 = vpop.f32.mrb[0].mxu0
    %v355 = vadd.f32 %v94, %v354
    %v356 = vpop.f32.mrb[0].mxu0
    %v357 = vadd.f32 %v98, %v356
    %358 = vmatprep.mubr.bf16.mxu0 0
    %359 = vmatmul.mubr.bf16.gmra.mrb[0].mxu0 %v221
    %v360 = vpop.f32.mrb[0].mxu0
    %v361 = vadd.f32 %v94, %v360
    %v362 = vpop.f32.mrb[0].mxu0
    %v363 = vadd.f32 %v98, %v362
    %v364 = vpop.f32.mrb[0].mxu0
    %v365 = vadd.f32 %v94, %v364
    %v366 = vpop.f32.mrb[0].mxu0
    %v367 = vadd.f32 %v98, %v366
    %368 = vmatprep.mubr.bf16.mxu0 0
    %369 = vmatmul.mubr.bf16.gmra.mrb[0].mxu0 %v224
    %v370 = vpop.f32.mrb[0].mxu0
    %v371 = vadd.f32 %v94, %v370
    %v372 = vpop.f32.mrb[0].mxu0
    %v373 = vadd.f32 %v98, %v372
    %v374 = vpop.f32.mrb[0].mxu0
    %v375 = vadd.f32 %v94, %v374
    %v376 = vpop.f32.mrb[0].mxu0
    %v377 = vadd.f32 %v98, %v376
    %378 = vmatprep.mubr.bf16.mxu0 0
    %379 = vmatmul.mubr.bf16.gmra.mrb[0].mxu0 %v227
    %v380 = vpop.f32.mrb[0].mxu0
    %v381 = vadd.f32 %v94, %v380
    %v382 = vpop.f32.mrb[0].mxu0
    %v383 = vadd.f32 %v98, %v382
    %v384 = vpop.f32.mrb[0].mxu0
    %v385 = vadd.f32 %v94, %v384
    %v386 = vpop.f32.mrb[0].mxu0
    %v387 = vadd.f32 %v98, %v386
    %388 = vmatprep.mubr.bf16.mxu0 0
    %389 = vmatmul.mubr.bf16.gmra.mrb[0].mxu0 %v230
    %v390 = vpop.f32.mrb[0].mxu0
    %v391 = vadd.f32 %v94, %v390
    %v392 = vpop.f32.mrb[0].mxu0
    %v393 = vadd.f32 %v98, %v392
    %v394 = vpop.f32.mrb[0].mxu0
    %v395 = vadd.f32 %v94, %v394
    %v396 = vpop.f32.mrb[0].mxu0
    %v397 = vadd.f32 %v98, %v396
    %398 = vmatprep.mubr.bf16.mxu0 0
    %399 = vmatmul.mubr.bf16.gmra.mrb[0].mxu0 %v233
    %v400 = vpop.f32.mrb[0].mxu0
    %v401 = vadd.f32 %v94, %v400
    %v402 = vpop.f32.mrb[0].mxu0
    %v403 = vadd.f32 %v98, %v402
    %v404 = vpop.f32.mrb[0].mxu0
    %v405 = vadd.f32 %v94, %v404
    %v406 = vpop.f32.mrb[0].mxu0
    %v407 = vadd.f32 %v98, %v406
    %408 = vmatprep.mubr.bf16.mxu0 0
    %409 = vmatmul.mubr.bf16.gmra.mrb[0].mxu0 %v236
    %v410 = vpop.f32.mrb[0].mxu0
    %v411 = vadd.f32 %v94, %v410
    %v412 = vpop.f32.mrb[0].mxu0
    %v413 = vadd.f32 %v98, %v412
    %v414 = vpop.f32.mrb[0].mxu0
    %v415 = vadd.f32 %v94, %v414
    %v416 = vpop.f32.mrb[0].mxu0
    %v417 = vadd.f32 %v98, %v416
    %418 = vmatprep.mubr.bf16.mxu0 0
    %419 = vmatmul.mubr.bf16.gmra.mrb[0].mxu0 %v239
    %v420 = vpop.f32.mrb[0].mxu0
    %v421 = vadd.f32 %v94, %v420
    %v422 = vpop.f32.mrb[0].mxu0
    %v423 = vadd.f32 %v98, %v422
    %v424 = vpop.f32.mrb[0].mxu0
    %v425 = vadd.f32 %v94, %v424
    %v426 = vpop.f32.mrb[0].mxu0
    %v427 = vadd.f32 %v98, %v426
    %428 = vmatprep.mubr.bf16.mxu0 0
    %429 = vmatmul.mubr.bf16.gmra.mrb[0].mxu0 %v242
    %v430 = vpop.f32.mrb[0].mxu0
    %v431 = vadd.f32 %v94, %v430
    %v432 = vpop.f32.mrb[0].mxu0
    %v433 = vadd.f32 %v98, %v432
    %v434 = vpop.f32.mrb[0].mxu0
    %v435 = vadd.f32 %v94, %v434
    %v436 = vpop.f32.mrb[0].mxu0
    %v437 = vadd.f32 %v98, %v436
    %438 = vmatprep.mubr.bf16.mxu0 0
    %439 = vmatmul.mubr.bf16.gmra.mrb[0].mxu0 %v245
    %v440 = vpop.f32.mrb[0].mxu0
    %v441 = vadd.f32 %v94, %v440
    %v442 = vpop.f32.mrb[0].mxu0
    %v443 = vadd.f32 %v98, %v442
    %v444 = vpop.f32.mrb[0].mxu0
    %v445 = vadd.f32 %v94, %v444
    %v446 = vpop.f32.mrb[0].mxu0
    %v447 = vadd.f32 %v98, %v446
    %448 = vmatprep.mubr.bf16.mxu0 0
    %449 = vmatmul.mubr.bf16.gmra.mrb[0].mxu0 %v248
    %v450 = vpop.f32.mrb[0].mxu0
    %v451 = vadd.f32 %v94, %v450
    %v452 = vpop.f32.mrb[0].mxu0
    %v453 = vadd.f32 %v98, %v452
    %v454 = vpop.f32.mrb[0].mxu0
    %v455 = vadd.f32 %v94, %v454
    %v456 = vpop.f32.mrb[0].mxu0
    %v457 = vadd.f32 %v98, %v456
    %458 = vdwg.mxu0
    %459 = vmatprep.subr.bf16.mxu0 %v264
    %460 = vmatpush1.bf16.msra.mxu0 %v261
    %461 = vmatprep.subr.bf16.mxu0 0
    %462 = vmatpush1.bf16.msra.mxu0 0
    %463 = vmatprep.subr.bf16.mxu0 0
    %464 = vmatpush1.bf16.msra.mxu0 0
    %465 = vmatprep.subr.bf16.mxu0 0
    %466 = vmatpush1.bf16.msra.mxu0 0
    %467 = vmatprep.subr.bf16.mxu0 0
    %468 = vmatpush1.bf16.msra.mxu0 0
    %469 = vmatprep.subr.bf16.mxu0 0
    %470 = vmatpush1.bf16.msra.mxu0 0
    %471 = vmatprep.subr.bf16.mxu0 0
    %472 = vmatpush1.bf16.msra.mxu0 0
    %473 = vmatprep.subr.bf16.mxu0 0
    %474 = vmatpush1.bf16.msra.mxu0 0
    %475 = vmatprep.subr.bf16.mxu0 0
    %476 = vmatpush1.bf16.msra.mxu0 0
    %477 = vmatprep.subr.bf16.mxu0 0
    %478 = vmatpush1.bf16.msra.mxu0 0
    %479 = vmatprep.subr.bf16.mxu0 0
    %480 = vmatpush1.bf16.msra.mxu0 0
    %481 = vmatprep.subr.bf16.mxu0 0
    %482 = vmatpush1.bf16.msra.mxu0 0
    %483 = vmatprep.subr.bf16.mxu0 0
    %484 = vmatpush1.bf16.msra.mxu0 0
    %485 = vmatprep.subr.bf16.mxu0 0
    %486 = vmatpush1.bf16.msra.mxu0 0
    %487 = vmatprep.subr.bf16.mxu0 0
    %488 = vmatpush1.bf16.msra.mxu0 0
    %489 = vmatprep.subr.bf16.mxu0 0
    %490 = vmatpush1.bf16.msra.mxu0 0
    %491 = vmatprep.mubr.bf16.mxu0 0
    %492 = vmatmul.mubr.bf16.gmra.mrb[0].mxu0 %v203
    %v493 = vpop.f32.mrb[0].mxu0
    %v494 = vadd.f32 %v102, %v493
    %v495 = vpop.f32.mrb[0].mxu0
    %v496 = vadd.f32 %v106, %v495
    %v497 = vpop.f32.mrb[0].mxu0
    %v498 = vadd.f32 %v102, %v497
    %v499 = vpop.f32.mrb[0].mxu0
    %v500 = vadd.f32 %v106, %v499
    %501 = vmatprep.mubr.bf16.mxu0 0
    %502 = vmatmul.mubr.bf16.gmra.mrb[0].mxu0 %v206
    %v503 = vpop.f32.mrb[0].mxu0
    %v504 = vadd.f32 %v102, %v503
    %v505 = vpop.f32.mrb[0].mxu0
    %v506 = vadd.f32 %v106, %v505
    %v507 = vpop.f32.mrb[0].mxu0
    %v508 = vadd.f32 %v102, %v507
    %v509 = vpop.f32.mrb[0].mxu0
    %v510 = vadd.f32 %v106, %v509
    %511 = vmatprep.mubr.bf16.mxu0 0
    %512 = vmatmul.mubr.bf16.gmra.mrb[0].mxu0 %v209
    %v513 = vpop.f32.mrb[0].mxu0
    %v514 = vadd.f32 %v102, %v513
    %v515 = vpop.f32.mrb[0].mxu0
    %v516 = vadd.f32 %v106, %v515
    %v517 = vpop.f32.mrb[0].mxu0
    %v518 = vadd.f32 %v102, %v517
    %v519 = vpop.f32.mrb[0].mxu0
    %v520 = vadd.f32 %v106, %v519
    %521 = vmatprep.mubr.bf16.mxu0 0
    %522 = vmatmul.mubr.bf16.gmra.mrb[0].mxu0 %v212
    %v523 = vpop.f32.mrb[0].mxu0
    %v524 = vadd.f32 %v102, %v523
    %v525 = vpop.f32.mrb[0].mxu0
    %v526 = vadd.f32 %v106, %v525
    %v527 = vpop.f32.mrb[0].mxu0
    %v528 = vadd.f32 %v102, %v527
    %v529 = vpop.f32.mrb[0].mxu0
    %v530 = vadd.f32 %v106, %v529
    %531 = vmatprep.mubr.bf16.mxu0 0
    %532 = vmatmul.mubr.bf16.gmra.mrb[0].mxu0 %v215
    %v533 = vpop.f32.mrb[0].mxu0
    %v534 = vadd.f32 %v102, %v533
    %v535 = vpop.f32.mrb[0].mxu0
    %v536 = vadd.f32 %v106, %v535
    %v537 = vpop.f32.mrb[0].mxu0
    %v538 = vadd.f32 %v102, %v537
    %v539 = vpop.f32.mrb[0].mxu0
    %v540 = vadd.f32 %v106, %v539
    %541 = vmatprep.mubr.bf16.mxu0 0
    %542 = vmatmul.mubr.bf16.gmra.mrb[0].mxu0 %v218
    %v543 = vpop.f32.mrb[0].mxu0
    %v544 = vadd.f32 %v102, %v543
    %v545 = vpop.f32.mrb[0].mxu0
    %v546 = vadd.f32 %v106, %v545
    %v547 = vpop.f32.mrb[0].mxu0
    %v548 = vadd.f32 %v102, %v547
    %v549 = vpop.f32.mrb[0].mxu0
    %v550 = vadd.f32 %v106, %v549
    %551 = vmatprep.mubr.bf16.mxu0 0
    %552 = vmatmul.mubr.bf16.gmra.mrb[0].mxu0 %v221
    %v553 = vpop.f32.mrb[0].mxu0
    %v554 = vadd.f32 %v102, %v553
    %v555 = vpop.f32.mrb[0].mxu0
    %v556 = vadd.f32 %v106, %v555
    %v557 = vpop.f32.mrb[0].mxu0
    %v558 = vadd.f32 %v102, %v557
    %v559 = vpop.f32.mrb[0].mxu0
    %v560 = vadd.f32 %v106, %v559
    %561 = vmatprep.mubr.bf16.mxu0 0
    %562 = vmatmul.mubr.bf16.gmra.mrb[0].mxu0 %v224
    %v563 = vpop.f32.mrb[0].mxu0
    %v564 = vadd.f32 %v102, %v563
    %v565 = vpop.f32.mrb[0].mxu0
    %v566 = vadd.f32 %v106, %v565
    %v567 = vpop.f32.mrb[0].mxu0
    %v568 = vadd.f32 %v102, %v567
    %v569 = vpop.f32.mrb[0].mxu0
    %v570 = vadd.f32 %v106, %v569
    %571 = vmatprep.mubr.bf16.mxu0 0
    %572 = vmatmul.mubr.bf16.gmra.mrb[0].mxu0 %v227
    %v573 = vpop.f32.mrb[0].mxu0
    %v574 = vadd.f32 %v102, %v573
    %v575 = vpop.f32.mrb[0].mxu0
    %v576 = vadd.f32 %v106, %v575
    %v577 = vpop.f32.mrb[0].mxu0
    %v578 = vadd.f32 %v102, %v577
    %v579 = vpop.f32.mrb[0].mxu0
    %v580 = vadd.f32 %v106, %v579
    %581 = vmatprep.mubr.bf16.mxu0 0
    %582 = vmatmul.mubr.bf16.gmra.mrb[0].mxu0 %v230
    %v583 = vpop.f32.mrb[0].mxu0
    %v584 = vadd.f32 %v102, %v583
    %v585 = vpop.f32.mrb[0].mxu0
    %v586 = vadd.f32 %v106, %v585
    %v587 = vpop.f32.mrb[0].mxu0
    %v588 = vadd.f32 %v102, %v587
    %v589 = vpop.f32.mrb[0].mxu0
    %v590 = vadd.f32 %v106, %v589
    %591 = vmatprep.mubr.bf16.mxu0 0
    %592 = vmatmul.mubr.bf16.gmra.mrb[0].mxu0 %v233
    %v593 = vpop.f32.mrb[0].mxu0
    %v594 = vadd.f32 %v102, %v593
    %v595 = vpop.f32.mrb[0].mxu0
    %v596 = vadd.f32 %v106, %v595
    %v597 = vpop.f32.mrb[0].mxu0
    %v598 = vadd.f32 %v102, %v597
    %v599 = vpop.f32.mrb[0].mxu0
    %v600 = vadd.f32 %v106, %v599
    %601 = vmatprep.mubr.bf16.mxu0 0
    %602 = vmatmul.mubr.bf16.gmra.mrb[0].mxu0 %v236
    %v603 = vpop.f32.mrb[0].mxu0
    %v604 = vadd.f32 %v102, %v603
    %v605 = vpop.f32.mrb[0].mxu0
    %v606 = vadd.f32 %v106, %v605
    %v607 = vpop.f32.mrb[0].mxu0
    %v608 = vadd.f32 %v102, %v607
    %v609 = vpop.f32.mrb[0].mxu0
    %v610 = vadd.f32 %v106, %v609
    %611 = vmatprep.mubr.bf16.mxu0 0
    %612 = vmatmul.mubr.bf16.gmra.mrb[0].mxu0 %v239
    %v613 = vpop.f32.mrb[0].mxu0
    %v614 = vadd.f32 %v102, %v613
    %v615 = vpop.f32.mrb[0].mxu0
    %v616 = vadd.f32 %v106, %v615
    %v617 = vpop.f32.mrb[0].mxu0
    %v618 = vadd.f32 %v102, %v617
    %v619 = vpop.f32.mrb[0].mxu0
    %v620 = vadd.f32 %v106, %v619
    %621 = vmatprep.mubr.bf16.mxu0 0
    %622 = vmatmul.mubr.bf16.gmra.mrb[0].mxu0 %v242
    %v623 = vpop.f32.mrb[0].mxu0
    %v624 = vadd.f32 %v102, %v623
    %v625 = vpop.f32.mrb[0].mxu0
    %v626 = vadd.f32 %v106, %v625
    %v627 = vpop.f32.mrb[0].mxu0
    %v628 = vadd.f32 %v102, %v627
    %v629 = vpop.f32.mrb[0].mxu0
    %v630 = vadd.f32 %v106, %v629
    %631 = vmatprep.mubr.bf16.mxu0 0
    %632 = vmatmul.mubr.bf16.gmra.mrb[0].mxu0 %v245
    %v633 = vpop.f32.mrb[0].mxu0
    %v634 = vadd.f32 %v102, %v633
    %v635 = vpop.f32.mrb[0].mxu0
    %v636 = vadd.f32 %v106, %v635
    %v637 = vpop.f32.mrb[0].mxu0
    %v638 = vadd.f32 %v102, %v637
    %v639 = vpop.f32.mrb[0].mxu0
    %v640 = vadd.f32 %v106, %v639
    %641 = vmatprep.mubr.bf16.mxu0 0
    %642 = vmatmul.mubr.bf16.gmra.mrb[0].mxu0 %v248
    %v643 = vpop.f32.mrb[0].mxu0
    %v644 = vadd.f32 %v102, %v643
    %v645 = vpop.f32.mrb[0].mxu0
    %v646 = vadd.f32 %v106, %v645
    %v647 = vpop.f32.mrb[0].mxu0
    %v648 = vadd.f32 %v102, %v647
    %v649 = vpop.f32.mrb[0].mxu0
    %v650 = vadd.f32 %v106, %v649
    %651 = vdwg.mxu0
    %v652 = vpack.c.bf16 %v305, %v301
    %v653 = vpack.c.bf16 %v307, %v303
    %v654 = vpack.c.bf16 %v498, %v494
    %v655 = vpack.c.bf16 %v500, %v496
    %v656 = vpack.c.bf16 %v315, %v311
    %v657 = vpack.c.bf16 %v317, %v313
    %v658 = vpack.c.bf16 %v508, %v504
    %v659 = vpack.c.bf16 %v510, %v506
    %v660 = vpack.c.bf16 %v325, %v321
    %v661 = vpack.c.bf16 %v327, %v323
    %v662 = vpack.c.bf16 %v518, %v514
    %v663 = vpack.c.bf16 %v520, %v516
    %v664 = vpack.c.bf16 %v335, %v331
    %v665 = vpack.c.bf16 %v337, %v333
    %v666 = vpack.c.bf16 %v528, %v524
    %v667 = vpack.c.bf16 %v530, %v526
    %v668 = vpack.c.bf16 %v345, %v341
    %v669 = vpack.c.bf16 %v347, %v343
    %v670 = vpack.c.bf16 %v538, %v534
    %v671 = vpack.c.bf16 %v540, %v536
    %v672 = vpack.c.bf16 %v355, %v351
    %v673 = vpack.c.bf16 %v357, %v353
    %v674 = vpack.c.bf16 %v548, %v544
    %v675 = vpack.c.bf16 %v550, %v546
    %v676 = vpack.c.bf16 %v365, %v361
    %v677 = vpack.c.bf16 %v367, %v363
    %v678 = vpack.c.bf16 %v558, %v554
    %v679 = vpack.c.bf16 %v560, %v556
    %v680 = vpack.c.bf16 %v375, %v371
    %v681 = vpack.c.bf16 %v377, %v373
    %v682 = vpack.c.bf16 %v568, %v564
    %v683 = vpack.c.bf16 %v570, %v566
    %v684 = vpack.c.bf16 %v385, %v381
    %v685 = vpack.c.bf16 %v387, %v383
    %v686 = vpack.c.bf16 %v578, %v574
    %v687 = vpack.c.bf16 %v580, %v576
    %v688 = vpack.c.bf16 %v395, %v391
    %v689 = vpack.c.bf16 %v397, %v393
    %v690 = vpack.c.bf16 %v588, %v584
    %v691 = vpack.c.bf16 %v590, %v586
    %v692 = vpack.c.bf16 %v405, %v401
    %v693 = vpack.c.bf16 %v407, %v403
    %v694 = vpack.c.bf16 %v598, %v594
    %v695 = vpack.c.bf16 %v600, %v596
    %v696 = vpack.c.bf16 %v415, %v411
    %v697 = vpack.c.bf16 %v417, %v413
    %v698 = vpack.c.bf16 %v608, %v604
    %v699 = vpack.c.bf16 %v610, %v606
    %v700 = vpack.c.bf16 %v425, %v421
    %v701 = vpack.c.bf16 %v427, %v423
    %v702 = vpack.c.bf16 %v618, %v614
    %v703 = vpack.c.bf16 %v620, %v616
    %v704 = vpack.c.bf16 %v435, %v431
    %v705 = vpack.c.bf16 %v437, %v433
    %v706 = vpack.c.bf16 %v628, %v624
    %v707 = vpack.c.bf16 %v630, %v626
    %v708 = vpack.c.bf16 %v445, %v441
    %v709 = vpack.c.bf16 %v447, %v443
    %v710 = vpack.c.bf16 %v638, %v634
    %v711 = vpack.c.bf16 %v640, %v636
    %v712 = vpack.c.bf16 %v455, %v451
    %v713 = vpack.c.bf16 %v457, %v453
    %v714 = vpack.c.bf16 %v648, %v644
    %v715 = vpack.c.bf16 %v650, %v646
    %v716 = vmax.bf16 %v652, 0
    %v717 = vmax.bf16 %v653, 0
    %v718 = vmax.bf16 %v654, 0
    %v719 = vmax.bf16 %v655, 0
    %v720 = vmax.bf16 %v656, 0
    %v721 = vmax.bf16 %v657, 0
    %v722 = vmax.bf16 %v658, 0
    %v723 = vmax.bf16 %v659, 0
    %v724 = vmax.bf16 %v660, 0
    %v725 = vmax.bf16 %v661, 0
    %v726 = vmax.bf16 %v662, 0
    %v727 = vmax.bf16 %v663, 0
    %v728 = vmax.bf16 %v664, 0
    %v729 = vmax.bf16 %v665, 0
    %v730 = vmax.bf16 %v666, 0
    %v731 = vmax.bf16 %v667, 0
    %v732 = vmax.bf16 %v668, 0
    %v733 = vmax.bf16 %v669, 0
    %v734 = vmax.bf16 %v670, 0
    %v735 = vmax.bf16 %v671, 0
    %v736 = vmax.bf16 %v672, 0
    %v737 = vmax.bf16 %v673, 0
    %v738 = vmax.bf16 %v674, 0
    %v739 = vmax.bf16 %v675, 0
    %v740 = vmax.bf16 %v676, 0
    %v741 = vmax.bf16 %v677, 0
    %v742 = vmax.bf16 %v678, 0
    %v743 = vmax.bf16 %v679, 0
    %v744 = vmax.bf16 %v680, 0
    %v745 = vmax.bf16 %v681, 0
    %v746 = vmax.bf16 %v682, 0
    %v747 = vmax.bf16 %v683, 0
    %v748 = vmax.bf16 %v684, 0
    %v749 = vmax.bf16 %v685, 0
    %v750 = vmax.bf16 %v686, 0
    %v751 = vmax.bf16 %v687, 0
    %v752 = vmax.bf16 %v688, 0
    %v753 = vmax.bf16 %v689, 0
    %v754 = vmax.bf16 %v690, 0
    %v755 = vmax.bf16 %v691, 0
    %v756 = vmax.bf16 %v692, 0
    %v757 = vmax.bf16 %v693, 0
    %v758 = vmax.bf16 %v694, 0
    %v759 = vmax.bf16 %v695, 0
    %v760 = vmax.bf16 %v696, 0
    %v761 = vmax.bf16 %v697, 0
    %v762 = vmax.bf16 %v698, 0
    %v763 = vmax.bf16 %v699, 0
    %v764 = vmax.bf16 %v700, 0
    %v765 = vmax.bf16 %v701, 0
    %v766 = vmax.bf16 %v702, 0
    %v767 = vmax.bf16 %v703, 0
    %v768 = vmax.bf16 %v704, 0
    %v769 = vmax.bf16 %v705, 0
    %v770 = vmax.bf16 %v706, 0
    %v771 = vmax.bf16 %v707, 0
    %v772 = vmax.bf16 %v708, 0
    %v773 = vmax.bf16 %v709, 0
    %v774 = vmax.bf16 %v710, 0
    %v775 = vmax.bf16 %v711, 0
    %v776 = vmax.bf16 %v712, 0
    %v777 = vmax.bf16 %v713, 0
    %v778 = vmax.bf16 %v714, 0
    %v779 = vmax.bf16 %v715, 0
    %v780 = vld [vmem:[#allocation2] sm:$0xff]
    %v781 = vld [vmem:[#allocation2 + $0x8] sm:$0xff]
    %v782 = vld [vmem:[#allocation2 + $0x10] sm:$0xff]
    %v783 = vld [vmem:[#allocation2 + $0x18] sm:$0xff]
    %v784 = vld [vmem:[#allocation2 + $0x20] sm:$0xff]
    %v785 = vld [vmem:[#allocation2 + $0x28] sm:$0xff]
    %v786 = vld [vmem:[#allocation2 + $0x30] sm:$0xff]
    %v787 = vld [vmem:[#allocation2 + $0x38] sm:$0xff]
    %v788 = vld [vmem:[#allocation2 + $0x40] sm:$0xff]
    %v789 = vld [vmem:[#allocation2 + $0x48] sm:$0xff]
    %v790 = vld [vmem:[#allocation2 + $0x50] sm:$0xff]
    %v791 = vld [vmem:[#allocation2 + $0x58] sm:$0xff]
    %v792 = vld [vmem:[#allocation2 + $0x60] sm:$0xff]
    %v793 = vld [vmem:[#allocation2 + $0x68] sm:$0xff]
    %v794 = vld [vmem:[#allocation2 + $0x70] sm:$0xff]
    %v795 = vld [vmem:[#allocation2 + $0x78] sm:$0xff]
    %v796 = vld [vmem:[#allocation2 + $0x80] sm:$0xff]
    %v797 = vld [vmem:[#allocation2 + $0x88] sm:$0xff]
    %v798 = vld [vmem:[#allocation2 + $0x90] sm:$0xff]
    %v799 = vld [vmem:[#allocation2 + $0x98] sm:$0xff]
    %v800 = vld [vmem:[#allocation2 + $0xa0] sm:$0xff]
    %v801 = vld [vmem:[#allocation2 + $0xa8] sm:$0xff]
    %v802 = vld [vmem:[#allocation2 + $0xb0] sm:$0xff]
    %v803 = vld [vmem:[#allocation2 + $0xb8] sm:$0xff]
    %v804 = vld [vmem:[#allocation2 + $0xc0] sm:$0xff]
    %v805 = vld [vmem:[#allocation2 + $0xc8] sm:$0xff]
    %v806 = vld [vmem:[#allocation2 + $0xd0] sm:$0xff]
    %v807 = vld [vmem:[#allocation2 + $0xd8] sm:$0xff]
    %v808 = vld [vmem:[#allocation2 + $0xe0] sm:$0xff]
    %v809 = vld [vmem:[#allocation2 + $0xe8] sm:$0xff]
    %v810 = vld [vmem:[#allocation2 + $0xf0] sm:$0xff]
    %v811 = vld [vmem:[#allocation2 + $0xf8] sm:$0xff]
    %v812 = vld [vmem:[#allocation2 + $0x100] sm:$0xff]
    %v813 = vld [vmem:[#allocation2 + $0x108] sm:$0xff]
    %v814 = vld [vmem:[#allocation2 + $0x110] sm:$0xff]
    %v815 = vld [vmem:[#allocation2 + $0x118] sm:$0xff]
    %v816 = vld [vmem:[#allocation2 + $0x120] sm:$0xff]
    %v817 = vld [vmem:[#allocation2 + $0x128] sm:$0xff]
    %v818 = vld [vmem:[#allocation2 + $0x130] sm:$0xff]
    %v819 = vld [vmem:[#allocation2 + $0x138] sm:$0xff]
    %v820 = vld [vmem:[#allocation2 + $0x140] sm:$0xff]
    %v821 = vld [vmem:[#allocation2 + $0x148] sm:$0xff]
    %v822 = vld [vmem:[#allocation2 + $0x150] sm:$0xff]
    %v823 = vld [vmem:[#allocation2 + $0x158] sm:$0xff]
    %v824 = vld [vmem:[#allocation2 + $0x160] sm:$0xff]
    %v825 = vld [vmem:[#allocation2 + $0x168] sm:$0xff]
    %v826 = vld [vmem:[#allocation2 + $0x170] sm:$0xff]
    %v827 = vld [vmem:[#allocation2 + $0x178] sm:$0xff]
    %v828 = vld [vmem:[#allocation2 + $0x180] sm:$0xff]
    %v829 = vld [vmem:[#allocation2 + $0x188] sm:$0xff]
    %v830 = vld [vmem:[#allocation2 + $0x190] sm:$0xff]
    %v831 = vld [vmem:[#allocation2 + $0x198] sm:$0xff]
    %v832 = vld [vmem:[#allocation2 + $0x1a0] sm:$0xff]
    %v833 = vld [vmem:[#allocation2 + $0x1a8] sm:$0xff]
    %v834 = vld [vmem:[#allocation2 + $0x1b0] sm:$0xff]
    %v835 = vld [vmem:[#allocation2 + $0x1b8] sm:$0xff]
    %v836 = vld [vmem:[#allocation2 + $0x1c0] sm:$0xff]
    %v837 = vld [vmem:[#allocation2 + $0x1c8] sm:$0xff]
    %v838 = vld [vmem:[#allocation2 + $0x1d0] sm:$0xff]
    %v839 = vld [vmem:[#allocation2 + $0x1d8] sm:$0xff]
    %v840 = vld [vmem:[#allocation2 + $0x1e0] sm:$0xff]
    %v841 = vld [vmem:[#allocation2 + $0x1e8] sm:$0xff]
    %v842 = vld [vmem:[#allocation2 + $0x1f0] sm:$0xff]
    %v843 = vld [vmem:[#allocation2 + $0x1f8] sm:$0xff]
    %v844 = vld [vmem:[#allocation2 + $0x200] sm:$0xff]
    %v845 = vld [vmem:[#allocation2 + $0x208] sm:$0xff]
    %v846 = vld [vmem:[#allocation2 + $0x210] sm:$0xff]
    %v847 = vld [vmem:[#allocation2 + $0x218] sm:$0xff]
    %v848 = vld [vmem:[#allocation2 + $0x220] sm:$0xff]
    %v849 = vld [vmem:[#allocation2 + $0x228] sm:$0xff]
    %v850 = vld [vmem:[#allocation2 + $0x230] sm:$0xff]
    %v851 = vld [vmem:[#allocation2 + $0x238] sm:$0xff]
    %v852 = vld [vmem:[#allocation2 + $0x240] sm:$0xff]
    %v853 = vld [vmem:[#allocation2 + $0x248] sm:$0xff]
    %v854 = vld [vmem:[#allocation2 + $0x250] sm:$0xff]
    %v855 = vld [vmem:[#allocation2 + $0x258] sm:$0xff]
    %v856 = vld [vmem:[#allocation2 + $0x260] sm:$0xff]
    %v857 = vld [vmem:[#allocation2 + $0x268] sm:$0xff]
    %v858 = vld [vmem:[#allocation2 + $0x270] sm:$0xff]
    %v859 = vld [vmem:[#allocation2 + $0x278] sm:$0xff]
    %v860 = vld [vmem:[#allocation2 + $0x280] sm:$0xff]
    %v861 = vld [vmem:[#allocation2 + $0x288] sm:$0xff]
    %v862 = vld [vmem:[#allocation2 + $0x290] sm:$0xff]
    %v863 = vld [vmem:[#allocation2 + $0x298] sm:$0xff]
    %v864 = vld [vmem:[#allocation2 + $0x2a0] sm:$0xff]
    %v865 = vld [vmem:[#allocation2 + $0x2a8] sm:$0xff]
    %v866 = vld [vmem:[#allocation2 + $0x2b0] sm:$0xff]
    %v867 = vld [vmem:[#allocation2 + $0x2b8] sm:$0xff]
    %v868 = vld [vmem:[#allocation2 + $0x2c0] sm:$0xff]
    %v869 = vld [vmem:[#allocation2 + $0x2c8] sm:$0xff]
    %v870 = vld [vmem:[#allocation2 + $0x2d0] sm:$0xff]
    %v871 = vld [vmem:[#allocation2 + $0x2d8] sm:$0xff]
    %v872 = vld [vmem:[#allocation2 + $0x2e0] sm:$0xff]
    %v873 = vld [vmem:[#allocation2 + $0x2e8] sm:$0xff]
    %v874 = vld [vmem:[#allocation2 + $0x2f0] sm:$0xff]
    %v875 = vld [vmem:[#allocation2 + $0x2f8] sm:$0xff]
    %v876 = vld [vmem:[#allocation2 + $0x300] sm:$0xff]
    %v877 = vld [vmem:[#allocation2 + $0x308] sm:$0xff]
    %v878 = vld [vmem:[#allocation2 + $0x310] sm:$0xff]
    %v879 = vld [vmem:[#allocation2 + $0x318] sm:$0xff]
    %v880 = vld [vmem:[#allocation2 + $0x320] sm:$0xff]
    %v881 = vld [vmem:[#allocation2 + $0x328] sm:$0xff]
    %v882 = vld [vmem:[#allocation2 + $0x330] sm:$0xff]
    %v883 = vld [vmem:[#allocation2 + $0x338] sm:$0xff]
    %v884 = vld [vmem:[#allocation2 + $0x340] sm:$0xff]
    %v885 = vld [vmem:[#allocation2 + $0x348] sm:$0xff]
    %v886 = vld [vmem:[#allocation2 + $0x350] sm:$0xff]
    %v887 = vld [vmem:[#allocation2 + $0x358] sm:$0xff]
    %v888 = vld [vmem:[#allocation2 + $0x360] sm:$0xff]
    %v889 = vld [vmem:[#allocation2 + $0x368] sm:$0xff]
    %v890 = vld [vmem:[#allocation2 + $0x370] sm:$0xff]
    %v891 = vld [vmem:[#allocation2 + $0x378] sm:$0xff]
    %v892 = vld [vmem:[#allocation2 + $0x380] sm:$0xff]
    %v893 = vld [vmem:[#allocation2 + $0x388] sm:$0xff]
    %v894 = vld [vmem:[#allocation2 + $0x390] sm:$0xff]
    %v895 = vld [vmem:[#allocation2 + $0x398] sm:$0xff]
    %v896 = vld [vmem:[#allocation2 + $0x3a0] sm:$0xff]
    %v897 = vld [vmem:[#allocation2 + $0x3a8] sm:$0xff]
    %v898 = vld [vmem:[#allocation2 + $0x3b0] sm:$0xff]
    %v899 = vld [vmem:[#allocation2 + $0x3b8] sm:$0xff]
    %v900 = vld [vmem:[#allocation2 + $0x3c0] sm:$0xff]
    %v901 = vld [vmem:[#allocation2 + $0x3c8] sm:$0xff]
    %v902 = vld [vmem:[#allocation2 + $0x3d0] sm:$0xff]
    %v903 = vld [vmem:[#allocation2 + $0x3d8] sm:$0xff]
    %v904 = vld [vmem:[#allocation2 + $0x3e0] sm:$0xff]
    %v905 = vld [vmem:[#allocation2 + $0x3e8] sm:$0xff]
    %v906 = vld [vmem:[#allocation2 + $0x3f0] sm:$0xff]
    %v907 = vld [vmem:[#allocation2 + $0x3f8] sm:$0xff]
    %v908 = vld [vmem:[%s4] sm:$0xf]
    %v910 = vlaneseq
    %v911 = vshrl.u32 %v910, 7
    %v912 = vsub.s32 0, %v911
    %v913 = vrot.slane %v908, %v912
    %v914 = vlaneseq
    %v915 = vshrl.u32 %v914, 7
    %v916 = vsub.s32 1, %v915
    %v917 = vrot.slane %v908, %v916
    %v918 = vlaneseq
    %v919 = vshrl.u32 %v918, 7
    %v920 = vsub.s32 2, %v919
    %v921 = vrot.slane %v908, %v920
    %v922 = vlaneseq
    %v923 = vshrl.u32 %v922, 7
    %v924 = vsub.s32 3, %v923
    %v925 = vrot.slane %v908, %v924
    %v1058 = vunpack.c.l.b16 %v780
    %v1059 = vunpack.c.h.b16 %v780
    %v1060 = vunpack.c.l.b16 %v781
    %v1061 = vunpack.c.h.b16 %v781
    %v1062 = vunpack.c.l.b16 %v782
    %v1063 = vunpack.c.h.b16 %v782
    %v1064 = vunpack.c.l.b16 %v783
    %v1065 = vunpack.c.h.b16 %v783
    %v1066 = vunpack.c.l.b16 %v784
    %v1067 = vunpack.c.h.b16 %v784
    %v1068 = vunpack.c.l.b16 %v785
    %v1069 = vunpack.c.h.b16 %v785
    %v1070 = vunpack.c.l.b16 %v786
    %v1071 = vunpack.c.h.b16 %v786
    %v1072 = vunpack.c.l.b16 %v787
    %v1073 = vunpack.c.h.b16 %v787
    %v1074 = vunpack.c.l.b16 %v788
    %v1075 = vunpack.c.h.b16 %v788
    %v1076 = vunpack.c.l.b16 %v789
    %v1077 = vunpack.c.h.b16 %v789
    %v1078 = vunpack.c.l.b16 %v790
    %v1079 = vunpack.c.h.b16 %v790
    %v1080 = vunpack.c.l.b16 %v791
    %v1081 = vunpack.c.h.b16 %v791
    %v1082 = vunpack.c.l.b16 %v792
    %v1083 = vunpack.c.h.b16 %v792
    %v1084 = vunpack.c.l.b16 %v793
    %v1085 = vunpack.c.h.b16 %v793
    %v1086 = vunpack.c.l.b16 %v794
    %v1087 = vunpack.c.h.b16 %v794
    %v1088 = vunpack.c.l.b16 %v795
    %v1089 = vunpack.c.h.b16 %v795
    %v1090 = vunpack.c.l.b16 %v796
    %v1091 = vunpack.c.h.b16 %v796
    %v1092 = vunpack.c.l.b16 %v797
    %v1093 = vunpack.c.h.b16 %v797
    %v1094 = vunpack.c.l.b16 %v798
    %v1095 = vunpack.c.h.b16 %v798
    %v1096 = vunpack.c.l.b16 %v799
    %v1097 = vunpack.c.h.b16 %v799
    %v1098 = vunpack.c.l.b16 %v800
    %v1099 = vunpack.c.h.b16 %v800
    %v1100 = vunpack.c.l.b16 %v801
    %v1101 = vunpack.c.h.b16 %v801
    %v1102 = vunpack.c.l.b16 %v802
    %v1103 = vunpack.c.h.b16 %v802
    %v1104 = vunpack.c.l.b16 %v803
    %v1105 = vunpack.c.h.b16 %v803
    %v1106 = vunpack.c.l.b16 %v804
    %v1107 = vunpack.c.h.b16 %v804
    %v1108 = vunpack.c.l.b16 %v805
    %v1109 = vunpack.c.h.b16 %v805
    %v1110 = vunpack.c.l.b16 %v806
    %v1111 = vunpack.c.h.b16 %v806
    %v1112 = vunpack.c.l.b16 %v807
    %v1113 = vunpack.c.h.b16 %v807
    %v1114 = vunpack.c.l.b16 %v808
    %v1115 = vunpack.c.h.b16 %v808
    %v1116 = vunpack.c.l.b16 %v809
    %v1117 = vunpack.c.h.b16 %v809
    %v1118 = vunpack.c.l.b16 %v810
    %v1119 = vunpack.c.h.b16 %v810
    %v1120 = vunpack.c.l.b16 %v811
    %v1121 = vunpack.c.h.b16 %v811
    %v1122 = vunpack.c.l.b16 %v812
    %v1123 = vunpack.c.h.b16 %v812
    %v1124 = vunpack.c.l.b16 %v813
    %v1125 = vunpack.c.h.b16 %v813
    %v1126 = vunpack.c.l.b16 %v814
    %v1127 = vunpack.c.h.b16 %v814
    %v1128 = vunpack.c.l.b16 %v815
    %v1129 = vunpack.c.h.b16 %v815
    %v1130 = vunpack.c.l.b16 %v816
    %v1131 = vunpack.c.h.b16 %v816
    %v1132 = vunpack.c.l.b16 %v817
    %v1133 = vunpack.c.h.b16 %v817
    %v1134 = vunpack.c.l.b16 %v818
    %v1135 = vunpack.c.h.b16 %v818
    %v1136 = vunpack.c.l.b16 %v819
    %v1137 = vunpack.c.h.b16 %v819
    %v1138 = vunpack.c.l.b16 %v820
    %v1139 = vunpack.c.h.b16 %v820
    %v1140 = vunpack.c.l.b16 %v821
    %v1141 = vunpack.c.h.b16 %v821
    %v1142 = vunpack.c.l.b16 %v822
    %v1143 = vunpack.c.h.b16 %v822
    %v1144 = vunpack.c.l.b16 %v823
    %v1145 = vunpack.c.h.b16 %v823
    %v1146 = vunpack.c.l.b16 %v824
    %v1147 = vunpack.c.h.b16 %v824
    %v1148 = vunpack.c.l.b16 %v825
    %v1149 = vunpack.c.h.b16 %v825
    %v1150 = vunpack.c.l.b16 %v826
    %v1151 = vunpack.c.h.b16 %v826
    %v1152 = vunpack.c.l.b16 %v827
    %v1153 = vunpack.c.h.b16 %v827
    %v1154 = vunpack.c.l.b16 %v828
    %v1155 = vunpack.c.h.b16 %v828
    %v1156 = vunpack.c.l.b16 %v829
    %v1157 = vunpack.c.h.b16 %v829
    %v1158 = vunpack.c.l.b16 %v830
    %v1159 = vunpack.c.h.b16 %v830
    %v1160 = vunpack.c.l.b16 %v831
    %v1161 = vunpack.c.h.b16 %v831
    %v1162 = vunpack.c.l.b16 %v832
    %v1163 = vunpack.c.h.b16 %v832
    %v1164 = vunpack.c.l.b16 %v833
    %v1165 = vunpack.c.h.b16 %v833
    %v1166 = vunpack.c.l.b16 %v834
    %v1167 = vunpack.c.h.b16 %v834
    %v1168 = vunpack.c.l.b16 %v835
    %v1169 = vunpack.c.h.b16 %v835
    %v1170 = vunpack.c.l.b16 %v836
    %v1171 = vunpack.c.h.b16 %v836
    %v1172 = vunpack.c.l.b16 %v837
    %v1173 = vunpack.c.h.b16 %v837
    %v1174 = vunpack.c.l.b16 %v838
    %v1175 = vunpack.c.h.b16 %v838
    %v1176 = vunpack.c.l.b16 %v839
    %v1177 = vunpack.c.h.b16 %v839
    %v1178 = vunpack.c.l.b16 %v840
    %v1179 = vunpack.c.h.b16 %v840
    %v1180 = vunpack.c.l.b16 %v841
    %v1181 = vunpack.c.h.b16 %v841
    %v1182 = vunpack.c.l.b16 %v842
    %v1183 = vunpack.c.h.b16 %v842
    %v1184 = vunpack.c.l.b16 %v843
    %v1185 = vunpack.c.h.b16 %v843
    %v1186 = vunpack.c.l.b16 %v844
    %v1187 = vunpack.c.h.b16 %v844
    %v1188 = vunpack.c.l.b16 %v845
    %v1189 = vunpack.c.h.b16 %v845
    %v1190 = vunpack.c.l.b16 %v846
    %v1191 = vunpack.c.h.b16 %v846
    %v1192 = vunpack.c.l.b16 %v847
    %v1193 = vunpack.c.h.b16 %v847
    %v1194 = vunpack.c.l.b16 %v848
    %v1195 = vunpack.c.h.b16 %v848
    %v1196 = vunpack.c.l.b16 %v849
    %v1197 = vunpack.c.h.b16 %v849
    %v1198 = vunpack.c.l.b16 %v850
    %v1199 = vunpack.c.h.b16 %v850
    %v1200 = vunpack.c.l.b16 %v851
    %v1201 = vunpack.c.h.b16 %v851
    %v1202 = vunpack.c.l.b16 %v852
    %v1203 = vunpack.c.h.b16 %v852
    %v1204 = vunpack.c.l.b16 %v853
    %v1205 = vunpack.c.h.b16 %v853
    %v1206 = vunpack.c.l.b16 %v854
    %v1207 = vunpack.c.h.b16 %v854
    %v1208 = vunpack.c.l.b16 %v855
    %v1209 = vunpack.c.h.b16 %v855
    %v1210 = vunpack.c.l.b16 %v856
    %v1211 = vunpack.c.h.b16 %v856
    %v1212 = vunpack.c.l.b16 %v857
    %v1213 = vunpack.c.h.b16 %v857
    %v1214 = vunpack.c.l.b16 %v858
    %v1215 = vunpack.c.h.b16 %v858
    %v1216 = vunpack.c.l.b16 %v859
    %v1217 = vunpack.c.h.b16 %v859
    %v1218 = vunpack.c.l.b16 %v860
    %v1219 = vunpack.c.h.b16 %v860
    %v1220 = vunpack.c.l.b16 %v861
    %v1221 = vunpack.c.h.b16 %v861
    %v1222 = vunpack.c.l.b16 %v862
    %v1223 = vunpack.c.h.b16 %v862
    %v1224 = vunpack.c.l.b16 %v863
    %v1225 = vunpack.c.h.b16 %v863
    %v1226 = vunpack.c.l.b16 %v864
    %v1227 = vunpack.c.h.b16 %v864
    %v1228 = vunpack.c.l.b16 %v865
    %v1229 = vunpack.c.h.b16 %v865
    %v1230 = vunpack.c.l.b16 %v866
    %v1231 = vunpack.c.h.b16 %v866
    %v1232 = vunpack.c.l.b16 %v867
    %v1233 = vunpack.c.h.b16 %v867
    %v1234 = vunpack.c.l.b16 %v868
    %v1235 = vunpack.c.h.b16 %v868
    %v1236 = vunpack.c.l.b16 %v869
    %v1237 = vunpack.c.h.b16 %v869
    %v1238 = vunpack.c.l.b16 %v870
    %v1239 = vunpack.c.h.b16 %v870
    %v1240 = vunpack.c.l.b16 %v871
    %v1241 = vunpack.c.h.b16 %v871
    %v1242 = vunpack.c.l.b16 %v872
    %v1243 = vunpack.c.h.b16 %v872
    %v1244 = vunpack.c.l.b16 %v873
    %v1245 = vunpack.c.h.b16 %v873
    %v1246 = vunpack.c.l.b16 %v874
    %v1247 = vunpack.c.h.b16 %v874
    %v1248 = vunpack.c.l.b16 %v875
    %v1249 = vunpack.c.h.b16 %v875
    %v1250 = vunpack.c.l.b16 %v876
    %v1251 = vunpack.c.h.b16 %v876
    %v1252 = vunpack.c.l.b16 %v877
    %v1253 = vunpack.c.h.b16 %v877
    %v1254 = vunpack.c.l.b16 %v878
    %v1255 = vunpack.c.h.b16 %v878
    %v1256 = vunpack.c.l.b16 %v879
    %v1257 = vunpack.c.h.b16 %v879
    %v1258 = vunpack.c.l.b16 %v880
    %v1259 = vunpack.c.h.b16 %v880
    %v1260 = vunpack.c.l.b16 %v881
    %v1261 = vunpack.c.h.b16 %v881
    %v1262 = vunpack.c.l.b16 %v882
    %v1263 = vunpack.c.h.b16 %v882
    %v1264 = vunpack.c.l.b16 %v883
    %v1265 = vunpack.c.h.b16 %v883
    %v1266 = vunpack.c.l.b16 %v884
    %v1267 = vunpack.c.h.b16 %v884
    %v1268 = vunpack.c.l.b16 %v885
    %v1269 = vunpack.c.h.b16 %v885
    %v1270 = vunpack.c.l.b16 %v886
    %v1271 = vunpack.c.h.b16 %v886
    %v1272 = vunpack.c.l.b16 %v887
    %v1273 = vunpack.c.h.b16 %v887
    %v1274 = vunpack.c.l.b16 %v888
    %v1275 = vunpack.c.h.b16 %v888
    %v1276 = vunpack.c.l.b16 %v889
    %v1277 = vunpack.c.h.b16 %v889
    %v1278 = vunpack.c.l.b16 %v890
    %v1279 = vunpack.c.h.b16 %v890
    %v1280 = vunpack.c.l.b16 %v891
    %v1281 = vunpack.c.h.b16 %v891
    %v1282 = vunpack.c.l.b16 %v892
    %v1283 = vunpack.c.h.b16 %v892
    %v1284 = vunpack.c.l.b16 %v893
    %v1285 = vunpack.c.h.b16 %v893
    %v1286 = vunpack.c.l.b16 %v894
    %v1287 = vunpack.c.h.b16 %v894
    %v1288 = vunpack.c.l.b16 %v895
    %v1289 = vunpack.c.h.b16 %v895
    %v1290 = vunpack.c.l.b16 %v896
    %v1291 = vunpack.c.h.b16 %v896
    %v1292 = vunpack.c.l.b16 %v897
    %v1293 = vunpack.c.h.b16 %v897
    %v1294 = vunpack.c.l.b16 %v898
    %v1295 = vunpack.c.h.b16 %v898
    %v1296 = vunpack.c.l.b16 %v899
    %v1297 = vunpack.c.h.b16 %v899
    %v1298 = vunpack.c.l.b16 %v900
    %v1299 = vunpack.c.h.b16 %v900
    %v1300 = vunpack.c.l.b16 %v901
    %v1301 = vunpack.c.h.b16 %v901
    %v1302 = vunpack.c.l.b16 %v902
    %v1303 = vunpack.c.h.b16 %v902
    %v1304 = vunpack.c.l.b16 %v903
    %v1305 = vunpack.c.h.b16 %v903
    %v1306 = vunpack.c.l.b16 %v904
    %v1307 = vunpack.c.h.b16 %v904
    %v1308 = vunpack.c.l.b16 %v905
    %v1309 = vunpack.c.h.b16 %v905
    %v1310 = vunpack.c.l.b16 %v906
    %v1311 = vunpack.c.h.b16 %v906
    %v1312 = vunpack.c.l.b16 %v907
    %v1313 = vunpack.c.h.b16 %v907
    %v1314 = vpack.c.b16 %v1062, %v1058
    %v1315 = vpack.c.b16 %v1063, %v1059
    %v1316 = vpack.c.b16 %v1064, %v1060
    %v1317 = vpack.c.b16 %v1065, %v1061
    %v1318 = vpack.c.b16 %v1070, %v1066
    %v1319 = vpack.c.b16 %v1071, %v1067
    %v1320 = vpack.c.b16 %v1072, %v1068
    %v1321 = vpack.c.b16 %v1073, %v1069
    %v1322 = vpack.c.b16 %v1078, %v1074
    %v1323 = vpack.c.b16 %v1079, %v1075
    %v1324 = vpack.c.b16 %v1080, %v1076
    %v1325 = vpack.c.b16 %v1081, %v1077
    %v1326 = vpack.c.b16 %v1086, %v1082
    %v1327 = vpack.c.b16 %v1087, %v1083
    %v1328 = vpack.c.b16 %v1088, %v1084
    %v1329 = vpack.c.b16 %v1089, %v1085
    %v1330 = vpack.c.b16 %v1094, %v1090
    %v1331 = vpack.c.b16 %v1095, %v1091
    %v1332 = vpack.c.b16 %v1096, %v1092
    %v1333 = vpack.c.b16 %v1097, %v1093
    %v1334 = vpack.c.b16 %v1102, %v1098
    %v1335 = vpack.c.b16 %v1103, %v1099
    %v1336 = vpack.c.b16 %v1104, %v1100
    %v1337 = vpack.c.b16 %v1105, %v1101
    %v1338 = vpack.c.b16 %v1110, %v1106
    %v1339 = vpack.c.b16 %v1111, %v1107
    %v1340 = vpack.c.b16 %v1112, %v1108
    %v1341 = vpack.c.b16 %v1113, %v1109
    %v1342 = vpack.c.b16 %v1118, %v1114
    %v1343 = vpack.c.b16 %v1119, %v1115
    %v1344 = vpack.c.b16 %v1120, %v1116
    %v1345 = vpack.c.b16 %v1121, %v1117
    %v1346 = vpack.c.b16 %v1126, %v1122
    %v1347 = vpack.c.b16 %v1127, %v1123
    %v1348 = vpack.c.b16 %v1128, %v1124
    %v1349 = vpack.c.b16 %v1129, %v1125
    %v1350 = vpack.c.b16 %v1134, %v1130
    %v1351 = vpack.c.b16 %v1135, %v1131
    %v1352 = vpack.c.b16 %v1136, %v1132
    %v1353 = vpack.c.b16 %v1137, %v1133
    %v1354 = vpack.c.b16 %v1142, %v1138
    %v1355 = vpack.c.b16 %v1143, %v1139
    %v1356 = vpack.c.b16 %v1144, %v1140
    %v1357 = vpack.c.b16 %v1145, %v1141
    %v1358 = vpack.c.b16 %v1150, %v1146
    %v1359 = vpack.c.b16 %v1151, %v1147
    %v1360 = vpack.c.b16 %v1152, %v1148
    %v1361 = vpack.c.b16 %v1153, %v1149
    %v1362 = vpack.c.b16 %v1158, %v1154
    %v1363 = vpack.c.b16 %v1159, %v1155
    %v1364 = vpack.c.b16 %v1160, %v1156
    %v1365 = vpack.c.b16 %v1161, %v1157
    %v1366 = vpack.c.b16 %v1166, %v1162
    %v1367 = vpack.c.b16 %v1167, %v1163
    %v1368 = vpack.c.b16 %v1168, %v1164
    %v1369 = vpack.c.b16 %v1169, %v1165
    %v1370 = vpack.c.b16 %v1174, %v1170
    %v1371 = vpack.c.b16 %v1175, %v1171
    %v1372 = vpack.c.b16 %v1176, %v1172
    %v1373 = vpack.c.b16 %v1177, %v1173
    %v1374 = vpack.c.b16 %v1182, %v1178
    %v1375 = vpack.c.b16 %v1183, %v1179
    %v1376 = vpack.c.b16 %v1184, %v1180
    %v1377 = vpack.c.b16 %v1185, %v1181
    %v1378 = vpack.c.b16 %v1190, %v1186
    %v1379 = vpack.c.b16 %v1191, %v1187
    %v1380 = vpack.c.b16 %v1192, %v1188
    %v1381 = vpack.c.b16 %v1193, %v1189
    %v1382 = vpack.c.b16 %v1198, %v1194
    %v1383 = vpack.c.b16 %v1199, %v1195
    %v1384 = vpack.c.b16 %v1200, %v1196
    %v1385 = vpack.c.b16 %v1201, %v1197
    %v1386 = vpack.c.b16 %v1206, %v1202
    %v1387 = vpack.c.b16 %v1207, %v1203
    %v1388 = vpack.c.b16 %v1208, %v1204
    %v1389 = vpack.c.b16 %v1209, %v1205
    %v1390 = vpack.c.b16 %v1214, %v1210
    %v1391 = vpack.c.b16 %v1215, %v1211
    %v1392 = vpack.c.b16 %v1216, %v1212
    %v1393 = vpack.c.b16 %v1217, %v1213
    %v1394 = vpack.c.b16 %v1222, %v1218
    %v1395 = vpack.c.b16 %v1223, %v1219
    %v1396 = vpack.c.b16 %v1224, %v1220
    %v1397 = vpack.c.b16 %v1225, %v1221
    %v1398 = vpack.c.b16 %v1230, %v1226
    %v1399 = vpack.c.b16 %v1231, %v1227
    %v1400 = vpack.c.b16 %v1232, %v1228
    %v1401 = vpack.c.b16 %v1233, %v1229
    %v1402 = vpack.c.b16 %v1238, %v1234
    %v1403 = vpack.c.b16 %v1239, %v1235
    %v1404 = vpack.c.b16 %v1240, %v1236
    %v1405 = vpack.c.b16 %v1241, %v1237
    %v1406 = vpack.c.b16 %v1246, %v1242
    %v1407 = vpack.c.b16 %v1247, %v1243
    %v1408 = vpack.c.b16 %v1248, %v1244
    %v1409 = vpack.c.b16 %v1249, %v1245
    %v1410 = vpack.c.b16 %v1254, %v1250
    %v1411 = vpack.c.b16 %v1255, %v1251
    %v1412 = vpack.c.b16 %v1256, %v1252
    %v1413 = vpack.c.b16 %v1257, %v1253
    %v1414 = vpack.c.b16 %v1262, %v1258
    %v1415 = vpack.c.b16 %v1263, %v1259
    %v1416 = vpack.c.b16 %v1264, %v1260
    %v1417 = vpack.c.b16 %v1265, %v1261
    %v1418 = vpack.c.b16 %v1270, %v1266
    %v1419 = vpack.c.b16 %v1271, %v1267
    %v1420 = vpack.c.b16 %v1272, %v1268
    %v1421 = vpack.c.b16 %v1273, %v1269
    %v1422 = vpack.c.b16 %v1278, %v1274
    %v1423 = vpack.c.b16 %v1279, %v1275
    %v1424 = vpack.c.b16 %v1280, %v1276
    %v1425 = vpack.c.b16 %v1281, %v1277
    %v1426 = vpack.c.b16 %v1286, %v1282
    %v1427 = vpack.c.b16 %v1287, %v1283
    %v1428 = vpack.c.b16 %v1288, %v1284
    %v1429 = vpack.c.b16 %v1289, %v1285
    %v1430 = vpack.c.b16 %v1294, %v1290
    %v1431 = vpack.c.b16 %v1295, %v1291
    %v1432 = vpack.c.b16 %v1296, %v1292
    %v1433 = vpack.c.b16 %v1297, %v1293
    %v1434 = vpack.c.b16 %v1302, %v1298
    %v1435 = vpack.c.b16 %v1303, %v1299
    %v1436 = vpack.c.b16 %v1304, %v1300
    %v1437 = vpack.c.b16 %v1305, %v1301
    %v1438 = vpack.c.b16 %v1310, %v1306
    %v1439 = vpack.c.b16 %v1311, %v1307
    %v1440 = vpack.c.b16 %v1312, %v1308
    %v1441 = vpack.c.b16 %v1313, %v1309
    %1570 = vmatprep.subr.bf16.mxu0 %v1315
    %1571 = vmatpush1.bf16.msra.mxu0 %v1314
    %1572 = vmatprep.subr.bf16.mxu0 %v1319
    %1573 = vmatpush1.bf16.msra.mxu0 %v1318
    %1574 = vmatprep.subr.bf16.mxu0 %v1323
    %1575 = vmatpush1.bf16.msra.mxu0 %v1322
    %1576 = vmatprep.subr.bf16.mxu0 %v1327
    %1577 = vmatpush1.bf16.msra.mxu0 %v1326
    %1578 = vmatprep.subr.bf16.mxu0 %v1331
    %1579 = vmatpush1.bf16.msra.mxu0 %v1330
    %1580 = vmatprep.subr.bf16.mxu0 %v1335
    %1581 = vmatpush1.bf16.msra.mxu0 %v1334
    %1582 = vmatprep.subr.bf16.mxu0 %v1339
    %1583 = vmatpush1.bf16.msra.mxu0 %v1338
    %1584 = vmatprep.subr.bf16.mxu0 %v1343
    %1585 = vmatpush1.bf16.msra.mxu0 %v1342
    %1586 = vmatprep.subr.bf16.mxu0 %v1347
    %1587 = vmatpush1.bf16.msra.mxu0 %v1346
    %1588 = vmatprep.subr.bf16.mxu0 %v1351
    %1589 = vmatpush1.bf16.msra.mxu0 %v1350
    %1590 = vmatprep.subr.bf16.mxu0 %v1355
    %1591 = vmatpush1.bf16.msra.mxu0 %v1354
    %1592 = vmatprep.subr.bf16.mxu0 %v1359
    %1593 = vmatpush1.bf16.msra.mxu0 %v1358
    %1594 = vmatprep.subr.bf16.mxu0 %v1363
    %1595 = vmatpush1.bf16.msra.mxu0 %v1362
    %1596 = vmatprep.subr.bf16.mxu0 %v1367
    %1597 = vmatpush1.bf16.msra.mxu0 %v1366
    %1598 = vmatprep.subr.bf16.mxu0 %v1371
    %1599 = vmatpush1.bf16.msra.mxu0 %v1370
    %1600 = vmatprep.subr.bf16.mxu0 %v1375
    %1601 = vmatpush1.bf16.msra.mxu0 %v1374
    %1602 = vmatprep.mubr.bf16.mxu0 %v717
    %1603 = vmatmul.mubr.bf16.gmra.mrb[0].mxu0 %v716
    %v1604 = vpop.f32.mrb[0].mxu0
    %v1605 = vadd.f32 %v913, %v1604
    %v1606 = vpop.f32.mrb[0].mxu0
    %v1607 = vadd.f32 %v917, %v1606
    %v1608 = vpop.f32.mrb[0].mxu0
    %v1609 = vadd.f32 %v913, %v1608
    %v1610 = vpop.f32.mrb[0].mxu0
    %v1611 = vadd.f32 %v917, %v1610
    %1612 = vmatprep.mubr.bf16.mxu0 %v721
    %1613 = vmatmul.mubr.bf16.gmra.mrb[0].mxu0 %v720
    %v1614 = vpop.f32.mrb[0].mxu0
    %v1615 = vadd.f32 %v913, %v1614
    %v1616 = vpop.f32.mrb[0].mxu0
    %v1617 = vadd.f32 %v917, %v1616
    %v1618 = vpop.f32.mrb[0].mxu0
    %v1619 = vadd.f32 %v913, %v1618
    %v1620 = vpop.f32.mrb[0].mxu0
    %v1621 = vadd.f32 %v917, %v1620
    %1622 = vmatprep.mubr.bf16.mxu0 %v725
    %1623 = vmatmul.mubr.bf16.gmra.mrb[0].mxu0 %v724
    %v1624 = vpop.f32.mrb[0].mxu0
    %v1625 = vadd.f32 %v913, %v1624
    %v1626 = vpop.f32.mrb[0].mxu0
    %v1627 = vadd.f32 %v917, %v1626
    %v1628 = vpop.f32.mrb[0].mxu0
    %v1629 = vadd.f32 %v913, %v1628
    %v1630 = vpop.f32.mrb[0].mxu0
    %v1631 = vadd.f32 %v917, %v1630
    %1632 = vmatprep.mubr.bf16.mxu0 %v729
    %1633 = vmatmul.mubr.bf16.gmra.mrb[0].mxu0 %v728
    %v1634 = vpop.f32.mrb[0].mxu0
    %v1635 = vadd.f32 %v913, %v1634
    %v1636 = vpop.f32.mrb[0].mxu0
    %v1637 = vadd.f32 %v917, %v1636
    %v1638 = vpop.f32.mrb[0].mxu0
    %v1639 = vadd.f32 %v913, %v1638
    %v1640 = vpop.f32.mrb[0].mxu0
    %v1641 = vadd.f32 %v917, %v1640
    %1642 = vmatprep.mubr.bf16.mxu0 %v733
    %1643 = vmatmul.mubr.bf16.gmra.mrb[0].mxu0 %v732
    %v1644 = vpop.f32.mrb[0].mxu0
    %v1645 = vadd.f32 %v913, %v1644
    %v1646 = vpop.f32.mrb[0].mxu0
    %v1647 = vadd.f32 %v917, %v1646
    %v1648 = vpop.f32.mrb[0].mxu0
    %v1649 = vadd.f32 %v913, %v1648
    %v1650 = vpop.f32.mrb[0].mxu0
    %v1651 = vadd.f32 %v917, %v1650
    %1652 = vmatprep.mubr.bf16.mxu0 %v737
    %1653 = vmatmul.mubr.bf16.gmra.mrb[0].mxu0 %v736
    %v1654 = vpop.f32.mrb[0].mxu0
    %v1655 = vadd.f32 %v913, %v1654
    %v1656 = vpop.f32.mrb[0].mxu0
    %v1657 = vadd.f32 %v917, %v1656
    %v1658 = vpop.f32.mrb[0].mxu0
    %v1659 = vadd.f32 %v913, %v1658
    %v1660 = vpop.f32.mrb[0].mxu0
    %v1661 = vadd.f32 %v917, %v1660
    %1662 = vmatprep.mubr.bf16.mxu0 %v741
    %1663 = vmatmul.mubr.bf16.gmra.mrb[0].mxu0 %v740
    %v1664 = vpop.f32.mrb[0].mxu0
    %v1665 = vadd.f32 %v913, %v1664
    %v1666 = vpop.f32.mrb[0].mxu0
    %v1667 = vadd.f32 %v917, %v1666
    %v1668 = vpop.f32.mrb[0].mxu0
    %v1669 = vadd.f32 %v913, %v1668
    %v1670 = vpop.f32.mrb[0].mxu0
    %v1671 = vadd.f32 %v917, %v1670
    %1672 = vmatprep.mubr.bf16.mxu0 %v745
    %1673 = vmatmul.mubr.bf16.gmra.mrb[0].mxu0 %v744
    %v1674 = vpop.f32.mrb[0].mxu0
    %v1675 = vadd.f32 %v913, %v1674
    %v1676 = vpop.f32.mrb[0].mxu0
    %v1677 = vadd.f32 %v917, %v1676
    %v1678 = vpop.f32.mrb[0].mxu0
    %v1679 = vadd.f32 %v913, %v1678
    %v1680 = vpop.f32.mrb[0].mxu0
    %v1681 = vadd.f32 %v917, %v1680
    %1682 = vmatprep.mubr.bf16.mxu0 %v749
    %1683 = vmatmul.mubr.bf16.gmra.mrb[0].mxu0 %v748
    %v1684 = vpop.f32.mrb[0].mxu0
    %v1685 = vadd.f32 %v913, %v1684
    %v1686 = vpop.f32.mrb[0].mxu0
    %v1687 = vadd.f32 %v917, %v1686
    %v1688 = vpop.f32.mrb[0].mxu0
    %v1689 = vadd.f32 %v913, %v1688
    %v1690 = vpop.f32.mrb[0].mxu0
    %v1691 = vadd.f32 %v917, %v1690
    %1692 = vmatprep.mubr.bf16.mxu0 %v753
    %1693 = vmatmul.mubr.bf16.gmra.mrb[0].mxu0 %v752
    %v1694 = vpop.f32.mrb[0].mxu0
    %v1695 = vadd.f32 %v913, %v1694
    %v1696 = vpop.f32.mrb[0].mxu0
    %v1697 = vadd.f32 %v917, %v1696
    %v1698 = vpop.f32.mrb[0].mxu0
    %v1699 = vadd.f32 %v913, %v1698
    %v1700 = vpop.f32.mrb[0].mxu0
    %v1701 = vadd.f32 %v917, %v1700
    %1702 = vmatprep.mubr.bf16.mxu0 %v757
    %1703 = vmatmul.mubr.bf16.gmra.mrb[0].mxu0 %v756
    %v1704 = vpop.f32.mrb[0].mxu0
    %v1705 = vadd.f32 %v913, %v1704
    %v1706 = vpop.f32.mrb[0].mxu0
    %v1707 = vadd.f32 %v917, %v1706
    %v1708 = vpop.f32.mrb[0].mxu0
    %v1709 = vadd.f32 %v913, %v1708
    %v1710 = vpop.f32.mrb[0].mxu0
    %v1711 = vadd.f32 %v917, %v1710
    %1712 = vmatprep.mubr.bf16.mxu0 %v761
    %1713 = vmatmul.mubr.bf16.gmra.mrb[0].mxu0 %v760
    %v1714 = vpop.f32.mrb[0].mxu0
    %v1715 = vadd.f32 %v913, %v1714
    %v1716 = vpop.f32.mrb[0].mxu0
    %v1717 = vadd.f32 %v917, %v1716
    %v1718 = vpop.f32.mrb[0].mxu0
    %v1719 = vadd.f32 %v913, %v1718
    %v1720 = vpop.f32.mrb[0].mxu0
    %v1721 = vadd.f32 %v917, %v1720
    %1722 = vmatprep.mubr.bf16.mxu0 %v765
    %1723 = vmatmul.mubr.bf16.gmra.mrb[0].mxu0 %v764
    %v1724 = vpop.f32.mrb[0].mxu0
    %v1725 = vadd.f32 %v913, %v1724
    %v1726 = vpop.f32.mrb[0].mxu0
    %v1727 = vadd.f32 %v917, %v1726
    %v1728 = vpop.f32.mrb[0].mxu0
    %v1729 = vadd.f32 %v913, %v1728
    %v1730 = vpop.f32.mrb[0].mxu0
    %v1731 = vadd.f32 %v917, %v1730
    %1732 = vmatprep.mubr.bf16.mxu0 %v769
    %1733 = vmatmul.mubr.bf16.gmra.mrb[0].mxu0 %v768
    %v1734 = vpop.f32.mrb[0].mxu0
    %v1735 = vadd.f32 %v913, %v1734
    %v1736 = vpop.f32.mrb[0].mxu0
    %v1737 = vadd.f32 %v917, %v1736
    %v1738 = vpop.f32.mrb[0].mxu0
    %v1739 = vadd.f32 %v913, %v1738
    %v1740 = vpop.f32.mrb[0].mxu0
    %v1741 = vadd.f32 %v917, %v1740
    %1742 = vmatprep.mubr.bf16.mxu0 %v773
    %1743 = vmatmul.mubr.bf16.gmra.mrb[0].mxu0 %v772
    %v1744 = vpop.f32.mrb[0].mxu0
    %v1745 = vadd.f32 %v913, %v1744
    %v1746 = vpop.f32.mrb[0].mxu0
    %v1747 = vadd.f32 %v917, %v1746
    %v1748 = vpop.f32.mrb[0].mxu0
    %v1749 = vadd.f32 %v913, %v1748
    %v1750 = vpop.f32.mrb[0].mxu0
    %v1751 = vadd.f32 %v917, %v1750
    %1752 = vmatprep.mubr.bf16.mxu0 %v777
    %1753 = vmatmul.mubr.bf16.gmra.mrb[0].mxu0 %v776
    %v1754 = vpop.f32.mrb[0].mxu0
    %v1755 = vadd.f32 %v913, %v1754
    %v1756 = vpop.f32.mrb[0].mxu0
    %v1757 = vadd.f32 %v917, %v1756
    %v1758 = vpop.f32.mrb[0].mxu0
    %v1759 = vadd.f32 %v913, %v1758
    %v1760 = vpop.f32.mrb[0].mxu0
    %v1761 = vadd.f32 %v917, %v1760
    %1762 = vdwg.mxu0
    %1763 = vmatprep.subr.bf16.mxu0 %v1379
    %1764 = vmatpush1.bf16.msra.mxu0 %v1378
    %1765 = vmatprep.subr.bf16.mxu0 %v1383
    %1766 = vmatpush1.bf16.msra.mxu0 %v1382
    %1767 = vmatprep.subr.bf16.mxu0 %v1387
    %1768 = vmatpush1.bf16.msra.mxu0 %v1386
    %1769 = vmatprep.subr.bf16.mxu0 %v1391
    %1770 = vmatpush1.bf16.msra.mxu0 %v1390
    %1771 = vmatprep.subr.bf16.mxu0 %v1395
    %1772 = vmatpush1.bf16.msra.mxu0 %v1394
    %1773 = vmatprep.subr.bf16.mxu0 %v1399
    %1774 = vmatpush1.bf16.msra.mxu0 %v1398
    %1775 = vmatprep.subr.bf16.mxu0 %v1403
    %1776 = vmatpush1.bf16.msra.mxu0 %v1402
    %1777 = vmatprep.subr.bf16.mxu0 %v1407
    %1778 = vmatpush1.bf16.msra.mxu0 %v1406
    %1779 = vmatprep.subr.bf16.mxu0 %v1411
    %1780 = vmatpush1.bf16.msra.mxu0 %v1410
    %1781 = vmatprep.subr.bf16.mxu0 %v1415
    %1782 = vmatpush1.bf16.msra.mxu0 %v1414
    %1783 = vmatprep.subr.bf16.mxu0 %v1419
    %1784 = vmatpush1.bf16.msra.mxu0 %v1418
    %1785 = vmatprep.subr.bf16.mxu0 %v1423
    %1786 = vmatpush1.bf16.msra.mxu0 %v1422
    %1787 = vmatprep.subr.bf16.mxu0 %v1427
    %1788 = vmatpush1.bf16.msra.mxu0 %v1426
    %1789 = vmatprep.subr.bf16.mxu0 %v1431
    %1790 = vmatpush1.bf16.msra.mxu0 %v1430
    %1791 = vmatprep.subr.bf16.mxu0 %v1435
    %1792 = vmatpush1.bf16.msra.mxu0 %v1434
    %1793 = vmatprep.subr.bf16.mxu0 %v1439
    %1794 = vmatpush1.bf16.msra.mxu0 %v1438
    %1795 = vmatprep.mubr.bf16.mxu0 %v719
    %1796 = vmatmul.mubr.bf16.gmra.mrb[0].mxu0 %v718
    %v1797 = vpop.f32.mrb[0].mxu0
    %v1798 = vadd.f32 %v1605, %v1797
    %v1799 = vpop.f32.mrb[0].mxu0
    %v1800 = vadd.f32 %v1607, %v1799
    %v1801 = vpop.f32.mrb[0].mxu0
    %v1802 = vadd.f32 %v1609, %v1801
    %v1803 = vpop.f32.mrb[0].mxu0
    %v1804 = vadd.f32 %v1611, %v1803
    %1805 = vmatprep.mubr.bf16.mxu0 %v723
    %1806 = vmatmul.mubr.bf16.gmra.mrb[0].mxu0 %v722
    %v1807 = vpop.f32.mrb[0].mxu0
    %v1808 = vadd.f32 %v1615, %v1807
    %v1809 = vpop.f32.mrb[0].mxu0
    %v1810 = vadd.f32 %v1617, %v1809
    %v1811 = vpop.f32.mrb[0].mxu0
    %v1812 = vadd.f32 %v1619, %v1811
    %v1813 = vpop.f32.mrb[0].mxu0
    %v1814 = vadd.f32 %v1621, %v1813
    %1815 = vmatprep.mubr.bf16.mxu0 %v727
    %1816 = vmatmul.mubr.bf16.gmra.mrb[0].mxu0 %v726
    %v1817 = vpop.f32.mrb[0].mxu0
    %v1818 = vadd.f32 %v1625, %v1817
    %v1819 = vpop.f32.mrb[0].mxu0
    %v1820 = vadd.f32 %v1627, %v1819
    %v1821 = vpop.f32.mrb[0].mxu0
    %v1822 = vadd.f32 %v1629, %v1821
    %v1823 = vpop.f32.mrb[0].mxu0
    %v1824 = vadd.f32 %v1631, %v1823
    %1825 = vmatprep.mubr.bf16.mxu0 %v731
    %1826 = vmatmul.mubr.bf16.gmra.mrb[0].mxu0 %v730
    %v1827 = vpop.f32.mrb[0].mxu0
    %v1828 = vadd.f32 %v1635, %v1827
    %v1829 = vpop.f32.mrb[0].mxu0
    %v1830 = vadd.f32 %v1637, %v1829
    %v1831 = vpop.f32.mrb[0].mxu0
    %v1832 = vadd.f32 %v1639, %v1831
    %v1833 = vpop.f32.mrb[0].mxu0
    %v1834 = vadd.f32 %v1641, %v1833
    %1835 = vmatprep.mubr.bf16.mxu0 %v735
    %1836 = vmatmul.mubr.bf16.gmra.mrb[0].mxu0 %v734
    %v1837 = vpop.f32.mrb[0].mxu0
    %v1838 = vadd.f32 %v1645, %v1837
    %v1839 = vpop.f32.mrb[0].mxu0
    %v1840 = vadd.f32 %v1647, %v1839
    %v1841 = vpop.f32.mrb[0].mxu0
    %v1842 = vadd.f32 %v1649, %v1841
    %v1843 = vpop.f32.mrb[0].mxu0
    %v1844 = vadd.f32 %v1651, %v1843
    %1845 = vmatprep.mubr.bf16.mxu0 %v739
    %1846 = vmatmul.mubr.bf16.gmra.mrb[0].mxu0 %v738
    %v1847 = vpop.f32.mrb[0].mxu0
    %v1848 = vadd.f32 %v1655, %v1847
    %v1849 = vpop.f32.mrb[0].mxu0
    %v1850 = vadd.f32 %v1657, %v1849
    %v1851 = vpop.f32.mrb[0].mxu0
    %v1852 = vadd.f32 %v1659, %v1851
    %v1853 = vpop.f32.mrb[0].mxu0
    %v1854 = vadd.f32 %v1661, %v1853
    %1855 = vmatprep.mubr.bf16.mxu0 %v743
    %1856 = vmatmul.mubr.bf16.gmra.mrb[0].mxu0 %v742
    %v1857 = vpop.f32.mrb[0].mxu0
    %v1858 = vadd.f32 %v1665, %v1857
    %v1859 = vpop.f32.mrb[0].mxu0
    %v1860 = vadd.f32 %v1667, %v1859
    %v1861 = vpop.f32.mrb[0].mxu0
    %v1862 = vadd.f32 %v1669, %v1861
    %v1863 = vpop.f32.mrb[0].mxu0
    %v1864 = vadd.f32 %v1671, %v1863
    %1865 = vmatprep.mubr.bf16.mxu0 %v747
    %1866 = vmatmul.mubr.bf16.gmra.mrb[0].mxu0 %v746
    %v1867 = vpop.f32.mrb[0].mxu0
    %v1868 = vadd.f32 %v1675, %v1867
    %v1869 = vpop.f32.mrb[0].mxu0
    %v1870 = vadd.f32 %v1677, %v1869
    %v1871 = vpop.f32.mrb[0].mxu0
    %v1872 = vadd.f32 %v1679, %v1871
    %v1873 = vpop.f32.mrb[0].mxu0
    %v1874 = vadd.f32 %v1681, %v1873
    %1875 = vmatprep.mubr.bf16.mxu0 %v751
    %1876 = vmatmul.mubr.bf16.gmra.mrb[0].mxu0 %v750
    %v1877 = vpop.f32.mrb[0].mxu0
    %v1878 = vadd.f32 %v1685, %v1877
    %v1879 = vpop.f32.mrb[0].mxu0
    %v1880 = vadd.f32 %v1687, %v1879
    %v1881 = vpop.f32.mrb[0].mxu0
    %v1882 = vadd.f32 %v1689, %v1881
    %v1883 = vpop.f32.mrb[0].mxu0
    %v1884 = vadd.f32 %v1691, %v1883
    %1885 = vmatprep.mubr.bf16.mxu0 %v755
    %1886 = vmatmul.mubr.bf16.gmra.mrb[0].mxu0 %v754
    %v1887 = vpop.f32.mrb[0].mxu0
    %v1888 = vadd.f32 %v1695, %v1887
    %v1889 = vpop.f32.mrb[0].mxu0
    %v1890 = vadd.f32 %v1697, %v1889
    %v1891 = vpop.f32.mrb[0].mxu0
    %v1892 = vadd.f32 %v1699, %v1891
    %v1893 = vpop.f32.mrb[0].mxu0
    %v1894 = vadd.f32 %v1701, %v1893
    %1895 = vmatprep.mubr.bf16.mxu0 %v759
    %1896 = vmatmul.mubr.bf16.gmra.mrb[0].mxu0 %v758
    %v1897 = vpop.f32.mrb[0].mxu0
    %v1898 = vadd.f32 %v1705, %v1897
    %v1899 = vpop.f32.mrb[0].mxu0
    %v1900 = vadd.f32 %v1707, %v1899
    %v1901 = vpop.f32.mrb[0].mxu0
    %v1902 = vadd.f32 %v1709, %v1901
    %v1903 = vpop.f32.mrb[0].mxu0
    %v1904 = vadd.f32 %v1711, %v1903
    %1905 = vmatprep.mubr.bf16.mxu0 %v763
    %1906 = vmatmul.mubr.bf16.gmra.mrb[0].mxu0 %v762
    %v1907 = vpop.f32.mrb[0].mxu0
    %v1908 = vadd.f32 %v1715, %v1907
    %v1909 = vpop.f32.mrb[0].mxu0
    %v1910 = vadd.f32 %v1717, %v1909
    %v1911 = vpop.f32.mrb[0].mxu0
    %v1912 = vadd.f32 %v1719, %v1911
    %v1913 = vpop.f32.mrb[0].mxu0
    %v1914 = vadd.f32 %v1721, %v1913
    %1915 = vmatprep.mubr.bf16.mxu0 %v767
    %1916 = vmatmul.mubr.bf16.gmra.mrb[0].mxu0 %v766
    %v1917 = vpop.f32.mrb[0].mxu0
    %v1918 = vadd.f32 %v1725, %v1917
    %v1919 = vpop.f32.mrb[0].mxu0
    %v1920 = vadd.f32 %v1727, %v1919
    %v1921 = vpop.f32.mrb[0].mxu0
    %v1922 = vadd.f32 %v1729, %v1921
    %v1923 = vpop.f32.mrb[0].mxu0
    %v1924 = vadd.f32 %v1731, %v1923
    %1925 = vmatprep.mubr.bf16.mxu0 %v771
    %1926 = vmatmul.mubr.bf16.gmra.mrb[0].mxu0 %v770
    %v1927 = vpop.f32.mrb[0].mxu0
    %v1928 = vadd.f32 %v1735, %v1927
    %v1929 = vpop.f32.mrb[0].mxu0
    %v1930 = vadd.f32 %v1737, %v1929
    %v1931 = vpop.f32.mrb[0].mxu0
    %v1932 = vadd.f32 %v1739, %v1931
    %v1933 = vpop.f32.mrb[0].mxu0
    %v1934 = vadd.f32 %v1741, %v1933
    %1935 = vmatprep.mubr.bf16.mxu0 %v775
    %1936 = vmatmul.mubr.bf16.gmra.mrb[0].mxu0 %v774
    %v1937 = vpop.f32.mrb[0].mxu0
    %v1938 = vadd.f32 %v1745, %v1937
    %v1939 = vpop.f32.mrb[0].mxu0
    %v1940 = vadd.f32 %v1747, %v1939
    %v1941 = vpop.f32.mrb[0].mxu0
    %v1942 = vadd.f32 %v1749, %v1941
    %v1943 = vpop.f32.mrb[0].mxu0
    %v1944 = vadd.f32 %v1751, %v1943
    %1945 = vmatprep.mubr.bf16.mxu0 %v779
    %1946 = vmatmul.mubr.bf16.gmra.mrb[0].mxu0 %v778
    %v1947 = vpop.f32.mrb[0].mxu0
    %v1948 = vadd.f32 %v1755, %v1947
    %v1949 = vpop.f32.mrb[0].mxu0
    %v1950 = vadd.f32 %v1757, %v1949
    %v1951 = vpop.f32.mrb[0].mxu0
    %v1952 = vadd.f32 %v1759, %v1951
    %v1953 = vpop.f32.mrb[0].mxu0
    %v1954 = vadd.f32 %v1761, %v1953
    %1955 = vdwg.mxu0
    %1956 = vmatprep.subr.bf16.mxu0 %v1317
    %1957 = vmatpush1.bf16.msra.mxu0 %v1316
    %1958 = vmatprep.subr.bf16.mxu0 %v1321
    %1959 = vmatpush1.bf16.msra.mxu0 %v1320
    %1960 = vmatprep.subr.bf16.mxu0 %v1325
    %1961 = vmatpush1.bf16.msra.mxu0 %v1324
    %1962 = vmatprep.subr.bf16.mxu0 %v1329
    %1963 = vmatpush1.bf16.msra.mxu0 %v1328
    %1964 = vmatprep.subr.bf16.mxu0 %v1333
    %1965 = vmatpush1.bf16.msra.mxu0 %v1332
    %1966 = vmatprep.subr.bf16.mxu0 %v1337
    %1967 = vmatpush1.bf16.msra.mxu0 %v1336
    %1968 = vmatprep.subr.bf16.mxu0 %v1341
    %1969 = vmatpush1.bf16.msra.mxu0 %v1340
    %1970 = vmatprep.subr.bf16.mxu0 %v1345
    %1971 = vmatpush1.bf16.msra.mxu0 %v1344
    %1972 = vmatprep.subr.bf16.mxu0 %v1349
    %1973 = vmatpush1.bf16.msra.mxu0 %v1348
    %1974 = vmatprep.subr.bf16.mxu0 %v1353
    %1975 = vmatpush1.bf16.msra.mxu0 %v1352
    %1976 = vmatprep.subr.bf16.mxu0 %v1357
    %1977 = vmatpush1.bf16.msra.mxu0 %v1356
    %1978 = vmatprep.subr.bf16.mxu0 %v1361
    %1979 = vmatpush1.bf16.msra.mxu0 %v1360
    %1980 = vmatprep.subr.bf16.mxu0 %v1365
    %1981 = vmatpush1.bf16.msra.mxu0 %v1364
    %1982 = vmatprep.subr.bf16.mxu0 %v1369
    %1983 = vmatpush1.bf16.msra.mxu0 %v1368
    %1984 = vmatprep.subr.bf16.mxu0 %v1373
    %1985 = vmatpush1.bf16.msra.mxu0 %v1372
    %1986 = vmatprep.subr.bf16.mxu0 %v1377
    %1987 = vmatpush1.bf16.msra.mxu0 %v1376
    %1988 = vmatprep.mubr.bf16.mxu0 %v717
    %1989 = vmatmul.mubr.bf16.gmra.mrb[0].mxu0 %v716
    %v1990 = vpop.f32.mrb[0].mxu0
    %v1991 = vadd.f32 %v921, %v1990
    %v1992 = vpop.f32.mrb[0].mxu0
    %v1993 = vadd.f32 %v925, %v1992
    %v1994 = vpop.f32.mrb[0].mxu0
    %v1995 = vadd.f32 %v921, %v1994
    %v1996 = vpop.f32.mrb[0].mxu0
    %v1997 = vadd.f32 %v925, %v1996
    %1998 = vmatprep.mubr.bf16.mxu0 %v721
    %1999 = vmatmul.mubr.bf16.gmra.mrb[0].mxu0 %v720
    %v2000 = vpop.f32.mrb[0].mxu0
    %v2001 = vadd.f32 %v921, %v2000
    %v2002 = vpop.f32.mrb[0].mxu0
    %v2003 = vadd.f32 %v925, %v2002
    %v2004 = vpop.f32.mrb[0].mxu0
    %v2005 = vadd.f32 %v921, %v2004
    %v2006 = vpop.f32.mrb[0].mxu0
    %v2007 = vadd.f32 %v925, %v2006
    %2008 = vmatprep.mubr.bf16.mxu0 %v725
    %2009 = vmatmul.mubr.bf16.gmra.mrb[0].mxu0 %v724
    %v2010 = vpop.f32.mrb[0].mxu0
    %v2011 = vadd.f32 %v921, %v2010
    %v2012 = vpop.f32.mrb[0].mxu0
    %v2013 = vadd.f32 %v925, %v2012
    %v2014 = vpop.f32.mrb[0].mxu0
    %v2015 = vadd.f32 %v921, %v2014
    %v2016 = vpop.f32.mrb[0].mxu0
    %v2017 = vadd.f32 %v925, %v2016
    %2018 = vmatprep.mubr.bf16.mxu0 %v729
    %2019 = vmatmul.mubr.bf16.gmra.mrb[0].mxu0 %v728
    %v2020 = vpop.f32.mrb[0].mxu0
    %v2021 = vadd.f32 %v921, %v2020
    %v2022 = vpop.f32.mrb[0].mxu0
    %v2023 = vadd.f32 %v925, %v2022
    %v2024 = vpop.f32.mrb[0].mxu0
    %v2025 = vadd.f32 %v921, %v2024
    %v2026 = vpop.f32.mrb[0].mxu0
    %v2027 = vadd.f32 %v925, %v2026
    %2028 = vmatprep.mubr.bf16.mxu0 %v733
    %2029 = vmatmul.mubr.bf16.gmra.mrb[0].mxu0 %v732
    %v2030 = vpop.f32.mrb[0].mxu0
    %v2031 = vadd.f32 %v921, %v2030
    %v2032 = vpop.f32.mrb[0].mxu0
    %v2033 = vadd.f32 %v925, %v2032
    %v2034 = vpop.f32.mrb[0].mxu0
    %v2035 = vadd.f32 %v921, %v2034
    %v2036 = vpop.f32.mrb[0].mxu0
    %v2037 = vadd.f32 %v925, %v2036
    %2038 = vmatprep.mubr.bf16.mxu0 %v737
    %2039 = vmatmul.mubr.bf16.gmra.mrb[0].mxu0 %v736
    %v2040 = vpop.f32.mrb[0].mxu0
    %v2041 = vadd.f32 %v921, %v2040
    %v2042 = vpop.f32.mrb[0].mxu0
    %v2043 = vadd.f32 %v925, %v2042
    %v2044 = vpop.f32.mrb[0].mxu0
    %v2045 = vadd.f32 %v921, %v2044
    %v2046 = vpop.f32.mrb[0].mxu0
    %v2047 = vadd.f32 %v925, %v2046
    %2048 = vmatprep.mubr.bf16.mxu0 %v741
    %2049 = vmatmul.mubr.bf16.gmra.mrb[0].mxu0 %v740
    %v2050 = vpop.f32.mrb[0].mxu0
    %v2051 = vadd.f32 %v921, %v2050
    %v2052 = vpop.f32.mrb[0].mxu0
    %v2053 = vadd.f32 %v925, %v2052
    %v2054 = vpop.f32.mrb[0].mxu0
    %v2055 = vadd.f32 %v921, %v2054
    %v2056 = vpop.f32.mrb[0].mxu0
    %v2057 = vadd.f32 %v925, %v2056
    %2058 = vmatprep.mubr.bf16.mxu0 %v745
    %2059 = vmatmul.mubr.bf16.gmra.mrb[0].mxu0 %v744
    %v2060 = vpop.f32.mrb[0].mxu0
    %v2061 = vadd.f32 %v921, %v2060
    %v2062 = vpop.f32.mrb[0].mxu0
    %v2063 = vadd.f32 %v925, %v2062
    %v2064 = vpop.f32.mrb[0].mxu0
    %v2065 = vadd.f32 %v921, %v2064
    %v2066 = vpop.f32.mrb[0].mxu0
    %v2067 = vadd.f32 %v925, %v2066
    %2068 = vmatprep.mubr.bf16.mxu0 %v749
    %2069 = vmatmul.mubr.bf16.gmra.mrb[0].mxu0 %v748
    %v2070 = vpop.f32.mrb[0].mxu0
    %v2071 = vadd.f32 %v921, %v2070
    %v2072 = vpop.f32.mrb[0].mxu0
    %v2073 = vadd.f32 %v925, %v2072
    %v2074 = vpop.f32.mrb[0].mxu0
    %v2075 = vadd.f32 %v921, %v2074
    %v2076 = vpop.f32.mrb[0].mxu0
    %v2077 = vadd.f32 %v925, %v2076
    %2078 = vmatprep.mubr.bf16.mxu0 %v753
    %2079 = vmatmul.mubr.bf16.gmra.mrb[0].mxu0 %v752
    %v2080 = vpop.f32.mrb[0].mxu0
    %v2081 = vadd.f32 %v921, %v2080
    %v2082 = vpop.f32.mrb[0].mxu0
    %v2083 = vadd.f32 %v925, %v2082
    %v2084 = vpop.f32.mrb[0].mxu0
    %v2085 = vadd.f32 %v921, %v2084
    %v2086 = vpop.f32.mrb[0].mxu0
    %v2087 = vadd.f32 %v925, %v2086
    %2088 = vmatprep.mubr.bf16.mxu0 %v757
    %2089 = vmatmul.mubr.bf16.gmra.mrb[0].mxu0 %v756
    %v2090 = vpop.f32.mrb[0].mxu0
    %v2091 = vadd.f32 %v921, %v2090
    %v2092 = vpop.f32.mrb[0].mxu0
    %v2093 = vadd.f32 %v925, %v2092
    %v2094 = vpop.f32.mrb[0].mxu0
    %v2095 = vadd.f32 %v921, %v2094
    %v2096 = vpop.f32.mrb[0].mxu0
    %v2097 = vadd.f32 %v925, %v2096
    %2098 = vmatprep.mubr.bf16.mxu0 %v761
    %2099 = vmatmul.mubr.bf16.gmra.mrb[0].mxu0 %v760
    %v2100 = vpop.f32.mrb[0].mxu0
    %v2101 = vadd.f32 %v921, %v2100
    %v2102 = vpop.f32.mrb[0].mxu0
    %v2103 = vadd.f32 %v925, %v2102
    %v2104 = vpop.f32.mrb[0].mxu0
    %v2105 = vadd.f32 %v921, %v2104
    %v2106 = vpop.f32.mrb[0].mxu0
    %v2107 = vadd.f32 %v925, %v2106
    %2108 = vmatprep.mubr.bf16.mxu0 %v765
    %2109 = vmatmul.mubr.bf16.gmra.mrb[0].mxu0 %v764
    %v2110 = vpop.f32.mrb[0].mxu0
    %v2111 = vadd.f32 %v921, %v2110
    %v2112 = vpop.f32.mrb[0].mxu0
    %v2113 = vadd.f32 %v925, %v2112
    %v2114 = vpop.f32.mrb[0].mxu0
    %v2115 = vadd.f32 %v921, %v2114
    %v2116 = vpop.f32.mrb[0].mxu0
    %v2117 = vadd.f32 %v925, %v2116
    %2118 = vmatprep.mubr.bf16.mxu0 %v769
    %2119 = vmatmul.mubr.bf16.gmra.mrb[0].mxu0 %v768
    %v2120 = vpop.f32.mrb[0].mxu0
    %v2121 = vadd.f32 %v921, %v2120
    %v2122 = vpop.f32.mrb[0].mxu0
    %v2123 = vadd.f32 %v925, %v2122
    %v2124 = vpop.f32.mrb[0].mxu0
    %v2125 = vadd.f32 %v921, %v2124
    %v2126 = vpop.f32.mrb[0].mxu0
    %v2127 = vadd.f32 %v925, %v2126
    %2128 = vmatprep.mubr.bf16.mxu0 %v773
    %2129 = vmatmul.mubr.bf16.gmra.mrb[0].mxu0 %v772
    %v2130 = vpop.f32.mrb[0].mxu0
    %v2131 = vadd.f32 %v921, %v2130
    %v2132 = vpop.f32.mrb[0].mxu0
    %v2133 = vadd.f32 %v925, %v2132
    %v2134 = vpop.f32.mrb[0].mxu0
    %v2135 = vadd.f32 %v921, %v2134
    %v2136 = vpop.f32.mrb[0].mxu0
    %v2137 = vadd.f32 %v925, %v2136
    %2138 = vmatprep.mubr.bf16.mxu0 %v777
    %2139 = vmatmul.mubr.bf16.gmra.mrb[0].mxu0 %v776
    %v2140 = vpop.f32.mrb[0].mxu0
    %v2141 = vadd.f32 %v921, %v2140
    %v2142 = vpop.f32.mrb[0].mxu0
    %v2143 = vadd.f32 %v925, %v2142
    %v2144 = vpop.f32.mrb[0].mxu0
    %v2145 = vadd.f32 %v921, %v2144
    %v2146 = vpop.f32.mrb[0].mxu0
    %v2147 = vadd.f32 %v925, %v2146
    %2148 = vdwg.mxu0
    %2149 = vmatprep.subr.bf16.mxu0 %v1381
    %2150 = vmatpush1.bf16.msra.mxu0 %v1380
    %2151 = vmatprep.subr.bf16.mxu0 %v1385
    %2152 = vmatpush1.bf16.msra.mxu0 %v1384
    %2153 = vmatprep.subr.bf16.mxu0 %v1389
    %2154 = vmatpush1.bf16.msra.mxu0 %v1388
    %2155 = vmatprep.subr.bf16.mxu0 %v1393
    %2156 = vmatpush1.bf16.msra.mxu0 %v1392
    %2157 = vmatprep.subr.bf16.mxu0 %v1397
    %2158 = vmatpush1.bf16.msra.mxu0 %v1396
    %2159 = vmatprep.subr.bf16.mxu0 %v1401
    %2160 = vmatpush1.bf16.msra.mxu0 %v1400
    %2161 = vmatprep.subr.bf16.mxu0 %v1405
    %2162 = vmatpush1.bf16.msra.mxu0 %v1404
    %2163 = vmatprep.subr.bf16.mxu0 %v1409
    %2164 = vmatpush1.bf16.msra.mxu0 %v1408
    %2165 = vmatprep.subr.bf16.mxu0 %v1413
    %2166 = vmatpush1.bf16.msra.mxu0 %v1412
    %2167 = vmatprep.subr.bf16.mxu0 %v1417
    %2168 = vmatpush1.bf16.msra.mxu0 %v1416
    %2169 = vmatprep.subr.bf16.mxu0 %v1421
    %2170 = vmatpush1.bf16.msra.mxu0 %v1420
    %2171 = vmatprep.subr.bf16.mxu0 %v1425
    %2172 = vmatpush1.bf16.msra.mxu0 %v1424
    %2173 = vmatprep.subr.bf16.mxu0 %v1429
    %2174 = vmatpush1.bf16.msra.mxu0 %v1428
    %2175 = vmatprep.subr.bf16.mxu0 %v1433
    %2176 = vmatpush1.bf16.msra.mxu0 %v1432
    %2177 = vmatprep.subr.bf16.mxu0 %v1437
    %2178 = vmatpush1.bf16.msra.mxu0 %v1436
    %2179 = vmatprep.subr.bf16.mxu0 %v1441
    %2180 = vmatpush1.bf16.msra.mxu0 %v1440
    %2181 = vmatprep.mubr.bf16.mxu0 %v719
    %2182 = vmatmul.mubr.bf16.gmra.mrb[0].mxu0 %v718
    %v2183 = vpop.f32.mrb[0].mxu0
    %v2184 = vadd.f32 %v1991, %v2183
    %v2185 = vpop.f32.mrb[0].mxu0
    %v2186 = vadd.f32 %v1993, %v2185
    %v2187 = vpop.f32.mrb[0].mxu0
    %v2188 = vadd.f32 %v1995, %v2187
    %v2189 = vpop.f32.mrb[0].mxu0
    %v2190 = vadd.f32 %v1997, %v2189
    %2191 = vmatprep.mubr.bf16.mxu0 %v723
    %2192 = vmatmul.mubr.bf16.gmra.mrb[0].mxu0 %v722
    %v2193 = vpop.f32.mrb[0].mxu0
    %v2194 = vadd.f32 %v2001, %v2193
    %v2195 = vpop.f32.mrb[0].mxu0
    %v2196 = vadd.f32 %v2003, %v2195
    %v2197 = vpop.f32.mrb[0].mxu0
    %v2198 = vadd.f32 %v2005, %v2197
    %v2199 = vpop.f32.mrb[0].mxu0
    %v2200 = vadd.f32 %v2007, %v2199
    %2201 = vmatprep.mubr.bf16.mxu0 %v727
    %2202 = vmatmul.mubr.bf16.gmra.mrb[0].mxu0 %v726
    %v2203 = vpop.f32.mrb[0].mxu0
    %v2204 = vadd.f32 %v2011, %v2203
    %v2205 = vpop.f32.mrb[0].mxu0
    %v2206 = vadd.f32 %v2013, %v2205
    %v2207 = vpop.f32.mrb[0].mxu0
    %v2208 = vadd.f32 %v2015, %v2207
    %v2209 = vpop.f32.mrb[0].mxu0
    %v2210 = vadd.f32 %v2017, %v2209
    %2211 = vmatprep.mubr.bf16.mxu0 %v731
    %2212 = vmatmul.mubr.bf16.gmra.mrb[0].mxu0 %v730
    %v2213 = vpop.f32.mrb[0].mxu0
    %v2214 = vadd.f32 %v2021, %v2213
    %v2215 = vpop.f32.mrb[0].mxu0
    %v2216 = vadd.f32 %v2023, %v2215
    %v2217 = vpop.f32.mrb[0].mxu0
    %v2218 = vadd.f32 %v2025, %v2217
    %v2219 = vpop.f32.mrb[0].mxu0
    %v2220 = vadd.f32 %v2027, %v2219
    %2221 = vmatprep.mubr.bf16.mxu0 %v735
    %2222 = vmatmul.mubr.bf16.gmra.mrb[0].mxu0 %v734
    %v2223 = vpop.f32.mrb[0].mxu0
    %v2224 = vadd.f32 %v2031, %v2223
    %v2225 = vpop.f32.mrb[0].mxu0
    %v2226 = vadd.f32 %v2033, %v2225
    %v2227 = vpop.f32.mrb[0].mxu0
    %v2228 = vadd.f32 %v2035, %v2227
    %v2229 = vpop.f32.mrb[0].mxu0
    %v2230 = vadd.f32 %v2037, %v2229
    %2231 = vmatprep.mubr.bf16.mxu0 %v739
    %2232 = vmatmul.mubr.bf16.gmra.mrb[0].mxu0 %v738
    %v2233 = vpop.f32.mrb[0].mxu0
    %v2234 = vadd.f32 %v2041, %v2233
    %v2235 = vpop.f32.mrb[0].mxu0
    %v2236 = vadd.f32 %v2043, %v2235
    %v2237 = vpop.f32.mrb[0].mxu0
    %v2238 = vadd.f32 %v2045, %v2237
    %v2239 = vpop.f32.mrb[0].mxu0
    %v2240 = vadd.f32 %v2047, %v2239
    %2241 = vmatprep.mubr.bf16.mxu0 %v743
    %2242 = vmatmul.mubr.bf16.gmra.mrb[0].mxu0 %v742
    %v2243 = vpop.f32.mrb[0].mxu0
    %v2244 = vadd.f32 %v2051, %v2243
    %v2245 = vpop.f32.mrb[0].mxu0
    %v2246 = vadd.f32 %v2053, %v2245
    %v2247 = vpop.f32.mrb[0].mxu0
    %v2248 = vadd.f32 %v2055, %v2247
    %v2249 = vpop.f32.mrb[0].mxu0
    %v2250 = vadd.f32 %v2057, %v2249
    %2251 = vmatprep.mubr.bf16.mxu0 %v747
    %2252 = vmatmul.mubr.bf16.gmra.mrb[0].mxu0 %v746
    %v2253 = vpop.f32.mrb[0].mxu0
    %v2254 = vadd.f32 %v2061, %v2253
    %v2255 = vpop.f32.mrb[0].mxu0
    %v2256 = vadd.f32 %v2063, %v2255
    %v2257 = vpop.f32.mrb[0].mxu0
    %v2258 = vadd.f32 %v2065, %v2257
    %v2259 = vpop.f32.mrb[0].mxu0
    %v2260 = vadd.f32 %v2067, %v2259
    %2261 = vmatprep.mubr.bf16.mxu0 %v751
    %2262 = vmatmul.mubr.bf16.gmra.mrb[0].mxu0 %v750
    %v2263 = vpop.f32.mrb[0].mxu0
    %v2264 = vadd.f32 %v2071, %v2263
    %v2265 = vpop.f32.mrb[0].mxu0
    %v2266 = vadd.f32 %v2073, %v2265
    %v2267 = vpop.f32.mrb[0].mxu0
    %v2268 = vadd.f32 %v2075, %v2267
    %v2269 = vpop.f32.mrb[0].mxu0
    %v2270 = vadd.f32 %v2077, %v2269
    %2271 = vmatprep.mubr.bf16.mxu0 %v755
    %2272 = vmatmul.mubr.bf16.gmra.mrb[0].mxu0 %v754
    %v2273 = vpop.f32.mrb[0].mxu0
    %v2274 = vadd.f32 %v2081, %v2273
    %v2275 = vpop.f32.mrb[0].mxu0
    %v2276 = vadd.f32 %v2083, %v2275
    %v2277 = vpop.f32.mrb[0].mxu0
    %v2278 = vadd.f32 %v2085, %v2277
    %v2279 = vpop.f32.mrb[0].mxu0
    %v2280 = vadd.f32 %v2087, %v2279
    %2281 = vmatprep.mubr.bf16.mxu0 %v759
    %2282 = vmatmul.mubr.bf16.gmra.mrb[0].mxu0 %v758
    %v2283 = vpop.f32.mrb[0].mxu0
    %v2284 = vadd.f32 %v2091, %v2283
    %v2285 = vpop.f32.mrb[0].mxu0
    %v2286 = vadd.f32 %v2093, %v2285
    %v2287 = vpop.f32.mrb[0].mxu0
    %v2288 = vadd.f32 %v2095, %v2287
    %v2289 = vpop.f32.mrb[0].mxu0
    %v2290 = vadd.f32 %v2097, %v2289
    %2291 = vmatprep.mubr.bf16.mxu0 %v763
    %2292 = vmatmul.mubr.bf16.gmra.mrb[0].mxu0 %v762
    %v2293 = vpop.f32.mrb[0].mxu0
    %v2294 = vadd.f32 %v2101, %v2293
    %v2295 = vpop.f32.mrb[0].mxu0
    %v2296 = vadd.f32 %v2103, %v2295
    %v2297 = vpop.f32.mrb[0].mxu0
    %v2298 = vadd.f32 %v2105, %v2297
    %v2299 = vpop.f32.mrb[0].mxu0
    %v2300 = vadd.f32 %v2107, %v2299
    %2301 = vmatprep.mubr.bf16.mxu0 %v767
    %2302 = vmatmul.mubr.bf16.gmra.mrb[0].mxu0 %v766
    %v2303 = vpop.f32.mrb[0].mxu0
    %v2304 = vadd.f32 %v2111, %v2303
    %v2305 = vpop.f32.mrb[0].mxu0
    %v2306 = vadd.f32 %v2113, %v2305
    %v2307 = vpop.f32.mrb[0].mxu0
    %v2308 = vadd.f32 %v2115, %v2307
    %v2309 = vpop.f32.mrb[0].mxu0
    %v2310 = vadd.f32 %v2117, %v2309
    %2311 = vmatprep.mubr.bf16.mxu0 %v771
    %2312 = vmatmul.mubr.bf16.gmra.mrb[0].mxu0 %v770
    %v2313 = vpop.f32.mrb[0].mxu0
    %v2314 = vadd.f32 %v2121, %v2313
    %v2315 = vpop.f32.mrb[0].mxu0
    %v2316 = vadd.f32 %v2123, %v2315
    %v2317 = vpop.f32.mrb[0].mxu0
    %v2318 = vadd.f32 %v2125, %v2317
    %v2319 = vpop.f32.mrb[0].mxu0
    %v2320 = vadd.f32 %v2127, %v2319
    %2321 = vmatprep.mubr.bf16.mxu0 %v775
    %2322 = vmatmul.mubr.bf16.gmra.mrb[0].mxu0 %v774
    %v2323 = vpop.f32.mrb[0].mxu0
    %v2324 = vadd.f32 %v2131, %v2323
    %v2325 = vpop.f32.mrb[0].mxu0
    %v2326 = vadd.f32 %v2133, %v2325
    %v2327 = vpop.f32.mrb[0].mxu0
    %v2328 = vadd.f32 %v2135, %v2327
    %v2329 = vpop.f32.mrb[0].mxu0
    %v2330 = vadd.f32 %v2137, %v2329
    %2331 = vmatprep.mubr.bf16.mxu0 %v779
    %2332 = vmatmul.mubr.bf16.gmra.mrb[0].mxu0 %v778
    %v2333 = vpop.f32.mrb[0].mxu0
    %v2334 = vadd.f32 %v2141, %v2333
    %v2335 = vpop.f32.mrb[0].mxu0
    %v2336 = vadd.f32 %v2143, %v2335
    %v2337 = vpop.f32.mrb[0].mxu0
    %v2338 = vadd.f32 %v2145, %v2337
    %v2339 = vpop.f32.mrb[0].mxu0
    %v2340 = vadd.f32 %v2147, %v2339
    %2341 = vdwg.mxu0
    %v2342 = vpack.c.bf16 %v1802, %v1798
    %v2343 = vpack.c.bf16 %v1804, %v1800
    %v2344 = vpack.c.bf16 %v2188, %v2184
    %v2345 = vpack.c.bf16 %v2190, %v2186
    %v2346 = vpack.c.bf16 %v1812, %v1808
    %v2347 = vpack.c.bf16 %v1814, %v1810
    %v2348 = vpack.c.bf16 %v2198, %v2194
    %v2349 = vpack.c.bf16 %v2200, %v2196
    %v2350 = vpack.c.bf16 %v1822, %v1818
    %v2351 = vpack.c.bf16 %v1824, %v1820
    %v2352 = vpack.c.bf16 %v2208, %v2204
    %v2353 = vpack.c.bf16 %v2210, %v2206
    %v2354 = vpack.c.bf16 %v1832, %v1828
    %v2355 = vpack.c.bf16 %v1834, %v1830
    %v2356 = vpack.c.bf16 %v2218, %v2214
    %v2357 = vpack.c.bf16 %v2220, %v2216
    %v2358 = vpack.c.bf16 %v1842, %v1838
    %v2359 = vpack.c.bf16 %v1844, %v1840
    %v2360 = vpack.c.bf16 %v2228, %v2224
    %v2361 = vpack.c.bf16 %v2230, %v2226
    %v2362 = vpack.c.bf16 %v1852, %v1848
    %v2363 = vpack.c.bf16 %v1854, %v1850
    %v2364 = vpack.c.bf16 %v2238, %v2234
    %v2365 = vpack.c.bf16 %v2240, %v2236
    %v2366 = vpack.c.bf16 %v1862, %v1858
    %v2367 = vpack.c.bf16 %v1864, %v1860
    %v2368 = vpack.c.bf16 %v2248, %v2244
    %v2369 = vpack.c.bf16 %v2250, %v2246
    %v2370 = vpack.c.bf16 %v1872, %v1868
    %v2371 = vpack.c.bf16 %v1874, %v1870
    %v2372 = vpack.c.bf16 %v2258, %v2254
    %v2373 = vpack.c.bf16 %v2260, %v2256
    %v2374 = vpack.c.bf16 %v1882, %v1878
    %v2375 = vpack.c.bf16 %v1884, %v1880
    %v2376 = vpack.c.bf16 %v2268, %v2264
    %v2377 = vpack.c.bf16 %v2270, %v2266
    %v2378 = vpack.c.bf16 %v1892, %v1888
    %v2379 = vpack.c.bf16 %v1894, %v1890
    %v2380 = vpack.c.bf16 %v2278, %v2274
    %v2381 = vpack.c.bf16 %v2280, %v2276
    %v2382 = vpack.c.bf16 %v1902, %v1898
    %v2383 = vpack.c.bf16 %v1904, %v1900
    %v2384 = vpack.c.bf16 %v2288, %v2284
    %v2385 = vpack.c.bf16 %v2290, %v2286
    %v2386 = vpack.c.bf16 %v1912, %v1908
    %v2387 = vpack.c.bf16 %v1914, %v1910
    %v2388 = vpack.c.bf16 %v2298, %v2294
    %v2389 = vpack.c.bf16 %v2300, %v2296
    %v2390 = vpack.c.bf16 %v1922, %v1918
    %v2391 = vpack.c.bf16 %v1924, %v1920
    %v2392 = vpack.c.bf16 %v2308, %v2304
    %v2393 = vpack.c.bf16 %v2310, %v2306
    %v2394 = vpack.c.bf16 %v1932, %v1928
    %v2395 = vpack.c.bf16 %v1934, %v1930
    %v2396 = vpack.c.bf16 %v2318, %v2314
    %v2397 = vpack.c.bf16 %v2320, %v2316
    %v2398 = vpack.c.bf16 %v1942, %v1938
    %v2399 = vpack.c.bf16 %v1944, %v1940
    %v2400 = vpack.c.bf16 %v2328, %v2324
    %v2401 = vpack.c.bf16 %v2330, %v2326
    %v2402 = vpack.c.bf16 %v1952, %v1948
    %v2403 = vpack.c.bf16 %v1954, %v1950
    %v2404 = vpack.c.bf16 %v2338, %v2334
    %v2405 = vpack.c.bf16 %v2340, %v2336
    %v2406 = vmax.bf16 %v2342, 0
    %v2407 = vmax.bf16 %v2343, 0
    %v2408 = vmax.bf16 %v2344, 0
    %v2409 = vmax.bf16 %v2345, 0
    %v2410 = vmax.bf16 %v2346, 0
    %v2411 = vmax.bf16 %v2347, 0
    %v2412 = vmax.bf16 %v2348, 0
    %v2413 = vmax.bf16 %v2349, 0
    %v2414 = vmax.bf16 %v2350, 0
    %v2415 = vmax.bf16 %v2351, 0
    %v2416 = vmax.bf16 %v2352, 0
    %v2417 = vmax.bf16 %v2353, 0
    %v2418 = vmax.bf16 %v2354, 0
    %v2419 = vmax.bf16 %v2355, 0
    %v2420 = vmax.bf16 %v2356, 0
    %v2421 = vmax.bf16 %v2357, 0
    %v2422 = vmax.bf16 %v2358, 0
    %v2423 = vmax.bf16 %v2359, 0
    %v2424 = vmax.bf16 %v2360, 0
    %v2425 = vmax.bf16 %v2361, 0
    %v2426 = vmax.bf16 %v2362, 0
    %v2427 = vmax.bf16 %v2363, 0
    %v2428 = vmax.bf16 %v2364, 0
    %v2429 = vmax.bf16 %v2365, 0
    %v2430 = vmax.bf16 %v2366, 0
    %v2431 = vmax.bf16 %v2367, 0
    %v2432 = vmax.bf16 %v2368, 0
    %v2433 = vmax.bf16 %v2369, 0
    %v2434 = vmax.bf16 %v2370, 0
    %v2435 = vmax.bf16 %v2371, 0
    %v2436 = vmax.bf16 %v2372, 0
    %v2437 = vmax.bf16 %v2373, 0
    %v2438 = vmax.bf16 %v2374, 0
    %v2439 = vmax.bf16 %v2375, 0
    %v2440 = vmax.bf16 %v2376, 0
    %v2441 = vmax.bf16 %v2377, 0
    %v2442 = vmax.bf16 %v2378, 0
    %v2443 = vmax.bf16 %v2379, 0
    %v2444 = vmax.bf16 %v2380, 0
    %v2445 = vmax.bf16 %v2381, 0
    %v2446 = vmax.bf16 %v2382, 0
    %v2447 = vmax.bf16 %v2383, 0
    %v2448 = vmax.bf16 %v2384, 0
    %v2449 = vmax.bf16 %v2385, 0
    %v2450 = vmax.bf16 %v2386, 0
    %v2451 = vmax.bf16 %v2387, 0
    %v2452 = vmax.bf16 %v2388, 0
    %v2453 = vmax.bf16 %v2389, 0
    %v2454 = vmax.bf16 %v2390, 0
    %v2455 = vmax.bf16 %v2391, 0
    %v2456 = vmax.bf16 %v2392, 0
    %v2457 = vmax.bf16 %v2393, 0
    %v2458 = vmax.bf16 %v2394, 0
    %v2459 = vmax.bf16 %v2395, 0
    %v2460 = vmax.bf16 %v2396, 0
    %v2461 = vmax.bf16 %v2397, 0
    %v2462 = vmax.bf16 %v2398, 0
    %v2463 = vmax.bf16 %v2399, 0
    %v2464 = vmax.bf16 %v2400, 0
    %v2465 = vmax.bf16 %v2401, 0
    %v2466 = vmax.bf16 %v2402, 0
    %v2467 = vmax.bf16 %v2403, 0
    %v2468 = vmax.bf16 %v2404, 0
    %v2469 = vmax.bf16 %v2405, 0
    %v2470 = vld [vmem:[#allocation4] sm:$0xf]
    %v2471 = vld [vmem:[#allocation4 + $0x4] sm:$0xf]
    %v2472 = vld [vmem:[#allocation4 + $0x8] sm:$0xf]
    %v2473 = vld [vmem:[#allocation4 + $0xc] sm:$0xf]
    %v2474 = vld [vmem:[#allocation4 + $0x10] sm:$0xf]
    %v2475 = vld [vmem:[#allocation4 + $0x14] sm:$0xf]
    %v2476 = vld [vmem:[#allocation4 + $0x18] sm:$0xf]
    %v2477 = vld [vmem:[#allocation4 + $0x1c] sm:$0xf]
    %v2478 = vld [vmem:[#allocation4 + $0x20] sm:$0xf]
    %v2479 = vld [vmem:[#allocation4 + $0x24] sm:$0xf]
    %v2480 = vld [vmem:[#allocation4 + $0x28] sm:$0xf]
    %v2481 = vld [vmem:[#allocation4 + $0x2c] sm:$0xf]
    %v2482 = vld [vmem:[#allocation4 + $0x30] sm:$0xf]
    %v2483 = vld [vmem:[#allocation4 + $0x34] sm:$0xf]
    %v2484 = vld [vmem:[#allocation4 + $0x38] sm:$0xf]
    %v2485 = vld [vmem:[#allocation4 + $0x3c] sm:$0xf]
    %v2486 = vld [vmem:[#allocation4 + $0x40] sm:$0xf]
    %v2487 = vld [vmem:[#allocation4 + $0x44] sm:$0xf]
    %v2488 = vld [vmem:[#allocation4 + $0x48] sm:$0xf]
    %v2489 = vld [vmem:[#allocation4 + $0x4c] sm:$0xf]
    %v2490 = vld [vmem:[#allocation4 + $0x50] sm:$0xf]
    %v2491 = vld [vmem:[#allocation4 + $0x54] sm:$0xf]
    %v2492 = vld [vmem:[#allocation4 + $0x58] sm:$0xf]
    %v2493 = vld [vmem:[#allocation4 + $0x5c] sm:$0xf]
    %v2494 = vld [vmem:[#allocation4 + $0x60] sm:$0xf]
    %v2495 = vld [vmem:[#allocation4 + $0x64] sm:$0xf]
    %v2496 = vld [vmem:[#allocation4 + $0x68] sm:$0xf]
    %v2497 = vld [vmem:[#allocation4 + $0x6c] sm:$0xf]
    %v2498 = vld [vmem:[#allocation4 + $0x70] sm:$0xf]
    %v2499 = vld [vmem:[#allocation4 + $0x74] sm:$0xf]
    %v2500 = vld [vmem:[#allocation4 + $0x78] sm:$0xf]
    %v2501 = vld [vmem:[#allocation4 + $0x7c] sm:$0xf]
    %v2502 = vld [vmem:[#allocation4 + $0x80] sm:$0xf]
    %v2503 = vld [vmem:[#allocation4 + $0x84] sm:$0xf]
    %v2504 = vld [vmem:[#allocation4 + $0x88] sm:$0xf]
    %v2505 = vld [vmem:[#allocation4 + $0x8c] sm:$0xf]
    %v2506 = vld [vmem:[#allocation4 + $0x90] sm:$0xf]
    %v2507 = vld [vmem:[#allocation4 + $0x94] sm:$0xf]
    %v2508 = vld [vmem:[#allocation4 + $0x98] sm:$0xf]
    %v2509 = vld [vmem:[#allocation4 + $0x9c] sm:$0xf]
    %v2510 = vld [vmem:[#allocation4 + $0xa0] sm:$0xf]
    %v2511 = vld [vmem:[#allocation4 + $0xa4] sm:$0xf]
    %v2512 = vld [vmem:[#allocation4 + $0xa8] sm:$0xf]
    %v2513 = vld [vmem:[#allocation4 + $0xac] sm:$0xf]
    %v2514 = vld [vmem:[#allocation4 + $0xb0] sm:$0xf]
    %v2515 = vld [vmem:[#allocation4 + $0xb4] sm:$0xf]
    %v2516 = vld [vmem:[#allocation4 + $0xb8] sm:$0xf]
    %v2517 = vld [vmem:[#allocation4 + $0xbc] sm:$0xf]
    %v2518 = vld [vmem:[#allocation4 + $0xc0] sm:$0xf]
    %v2519 = vld [vmem:[#allocation4 + $0xc4] sm:$0xf]
    %v2520 = vld [vmem:[#allocation4 + $0xc8] sm:$0xf]
    %v2521 = vld [vmem:[#allocation4 + $0xcc] sm:$0xf]
    %v2522 = vld [vmem:[#allocation4 + $0xd0] sm:$0xf]
    %v2523 = vld [vmem:[#allocation4 + $0xd4] sm:$0xf]
    %v2524 = vld [vmem:[#allocation4 + $0xd8] sm:$0xf]
    %v2525 = vld [vmem:[#allocation4 + $0xdc] sm:$0xf]
    %v2526 = vld [vmem:[#allocation4 + $0xe0] sm:$0xf]
    %v2527 = vld [vmem:[#allocation4 + $0xe4] sm:$0xf]
    %v2528 = vld [vmem:[#allocation4 + $0xe8] sm:$0xf]
    %v2529 = vld [vmem:[#allocation4 + $0xec] sm:$0xf]
    %v2530 = vld [vmem:[#allocation4 + $0xf0] sm:$0xf]
    %v2531 = vld [vmem:[#allocation4 + $0xf4] sm:$0xf]
    %v2532 = vld [vmem:[#allocation4 + $0xf8] sm:$0xf]
    %v2533 = vld [vmem:[#allocation4 + $0xfc] sm:$0xf]
    %v2534 = vld [vmem:[%s6] sm:$0x1]
    %v2536 = vlaneseq
    %v2537 = vshrl.u32 %v2536, 7
    %v2538 = vsub.s32 0, %v2537
    %v2539 = vrot.slane %v2534, %v2538
    %v2605 = vunpack.c.l.b16 %v2470
    %v2606 = vunpack.c.l.b16 %v2471
    %v2607 = vunpack.c.l.b16 %v2472
    %v2608 = vunpack.c.l.b16 %v2473
    %v2609 = vunpack.c.l.b16 %v2474
    %v2610 = vunpack.c.l.b16 %v2475
    %v2611 = vunpack.c.l.b16 %v2476
    %v2612 = vunpack.c.l.b16 %v2477
    %v2613 = vunpack.c.l.b16 %v2478
    %v2614 = vunpack.c.l.b16 %v2479
    %v2615 = vunpack.c.l.b16 %v2480
    %v2616 = vunpack.c.l.b16 %v2481
    %v2617 = vunpack.c.l.b16 %v2482
    %v2618 = vunpack.c.l.b16 %v2483
    %v2619 = vunpack.c.l.b16 %v2484
    %v2620 = vunpack.c.l.b16 %v2485
    %v2621 = vunpack.c.l.b16 %v2486
    %v2622 = vunpack.c.l.b16 %v2487
    %v2623 = vunpack.c.l.b16 %v2488
    %v2624 = vunpack.c.l.b16 %v2489
    %v2625 = vunpack.c.l.b16 %v2490
    %v2626 = vunpack.c.l.b16 %v2491
    %v2627 = vunpack.c.l.b16 %v2492
    %v2628 = vunpack.c.l.b16 %v2493
    %v2629 = vunpack.c.l.b16 %v2494
    %v2630 = vunpack.c.l.b16 %v2495
    %v2631 = vunpack.c.l.b16 %v2496
    %v2632 = vunpack.c.l.b16 %v2497
    %v2633 = vunpack.c.l.b16 %v2498
    %v2634 = vunpack.c.l.b16 %v2499
    %v2635 = vunpack.c.l.b16 %v2500
    %v2636 = vunpack.c.l.b16 %v2501
    %v2637 = vunpack.c.l.b16 %v2502
    %v2638 = vunpack.c.l.b16 %v2503
    %v2639 = vunpack.c.l.b16 %v2504
    %v2640 = vunpack.c.l.b16 %v2505
    %v2641 = vunpack.c.l.b16 %v2506
    %v2642 = vunpack.c.l.b16 %v2507
    %v2643 = vunpack.c.l.b16 %v2508
    %v2644 = vunpack.c.l.b16 %v2509
    %v2645 = vunpack.c.l.b16 %v2510
    %v2646 = vunpack.c.l.b16 %v2511
    %v2647 = vunpack.c.l.b16 %v2512
    %v2648 = vunpack.c.l.b16 %v2513
    %v2649 = vunpack.c.l.b16 %v2514
    %v2650 = vunpack.c.l.b16 %v2515
    %v2651 = vunpack.c.l.b16 %v2516
    %v2652 = vunpack.c.l.b16 %v2517
    %v2653 = vunpack.c.l.b16 %v2518
    %v2654 = vunpack.c.l.b16 %v2519
    %v2655 = vunpack.c.l.b16 %v2520
    %v2656 = vunpack.c.l.b16 %v2521
    %v2657 = vunpack.c.l.b16 %v2522
    %v2658 = vunpack.c.l.b16 %v2523
    %v2659 = vunpack.c.l.b16 %v2524
    %v2660 = vunpack.c.l.b16 %v2525
    %v2661 = vunpack.c.l.b16 %v2526
    %v2662 = vunpack.c.l.b16 %v2527
    %v2663 = vunpack.c.l.b16 %v2528
    %v2664 = vunpack.c.l.b16 %v2529
    %v2665 = vunpack.c.l.b16 %v2530
    %v2666 = vunpack.c.l.b16 %v2531
    %v2667 = vunpack.c.l.b16 %v2532
    %v2668 = vunpack.c.l.b16 %v2533
    %v2669 = vpack.c.b16 %v2606, %v2605
    %v2670 = vpack.c.b16 %v2608, %v2607
    %v2671 = vpack.c.b16 %v2610, %v2609
    %v2672 = vpack.c.b16 %v2612, %v2611
    %v2673 = vpack.c.b16 %v2614, %v2613
    %v2674 = vpack.c.b16 %v2616, %v2615
    %v2675 = vpack.c.b16 %v2618, %v2617
    %v2676 = vpack.c.b16 %v2620, %v2619
    %v2677 = vpack.c.b16 %v2622, %v2621
    %v2678 = vpack.c.b16 %v2624, %v2623
    %v2679 = vpack.c.b16 %v2626, %v2625
    %v2680 = vpack.c.b16 %v2628, %v2627
    %v2681 = vpack.c.b16 %v2630, %v2629
    %v2682 = vpack.c.b16 %v2632, %v2631
    %v2683 = vpack.c.b16 %v2634, %v2633
    %v2684 = vpack.c.b16 %v2636, %v2635
    %v2685 = vpack.c.b16 %v2638, %v2637
    %v2686 = vpack.c.b16 %v2640, %v2639
    %v2687 = vpack.c.b16 %v2642, %v2641
    %v2688 = vpack.c.b16 %v2644, %v2643
    %v2689 = vpack.c.b16 %v2646, %v2645
    %v2690 = vpack.c.b16 %v2648, %v2647
    %v2691 = vpack.c.b16 %v2650, %v2649
    %v2692 = vpack.c.b16 %v2652, %v2651
    %v2693 = vpack.c.b16 %v2654, %v2653
    %v2694 = vpack.c.b16 %v2656, %v2655
    %v2695 = vpack.c.b16 %v2658, %v2657
    %v2696 = vpack.c.b16 %v2660, %v2659
    %v2697 = vpack.c.b16 %v2662, %v2661
    %v2698 = vpack.c.b16 %v2664, %v2663
    %v2699 = vpack.c.b16 %v2666, %v2665
    %v2700 = vpack.c.b16 %v2668, %v2667
    %2733 = vmatprep.subr.bf16.mxu0 0
    %2734 = vmatpush1.bf16.msra.mxu0 %v2669
    %2735 = vmatprep.subr.bf16.mxu0 0
    %2736 = vmatpush1.bf16.msra.mxu0 %v2670
    %2737 = vmatprep.subr.bf16.mxu0 0
    %2738 = vmatpush1.bf16.msra.mxu0 %v2671
    %2739 = vmatprep.subr.bf16.mxu0 0
    %2740 = vmatpush1.bf16.msra.mxu0 %v2672
    %2741 = vmatprep.subr.bf16.mxu0 0
    %2742 = vmatpush1.bf16.msra.mxu0 %v2673
    %2743 = vmatprep.subr.bf16.mxu0 0
    %2744 = vmatpush1.bf16.msra.mxu0 %v2674
    %2745 = vmatprep.subr.bf16.mxu0 0
    %2746 = vmatpush1.bf16.msra.mxu0 %v2675
    %2747 = vmatprep.subr.bf16.mxu0 0
    %2748 = vmatpush1.bf16.msra.mxu0 %v2676
    %2749 = vmatprep.subr.bf16.mxu0 0
    %2750 = vmatpush1.bf16.msra.mxu0 %v2677
    %2751 = vmatprep.subr.bf16.mxu0 0
    %2752 = vmatpush1.bf16.msra.mxu0 %v2678
    %2753 = vmatprep.subr.bf16.mxu0 0
    %2754 = vmatpush1.bf16.msra.mxu0 %v2679
    %2755 = vmatprep.subr.bf16.mxu0 0
    %2756 = vmatpush1.bf16.msra.mxu0 %v2680
    %2757 = vmatprep.subr.bf16.mxu0 0
    %2758 = vmatpush1.bf16.msra.mxu0 %v2681
    %2759 = vmatprep.subr.bf16.mxu0 0
    %2760 = vmatpush1.bf16.msra.mxu0 %v2682
    %2761 = vmatprep.subr.bf16.mxu0 0
    %2762 = vmatpush1.bf16.msra.mxu0 %v2683
    %2763 = vmatprep.subr.bf16.mxu0 0
    %2764 = vmatpush1.bf16.msra.mxu0 %v2684
    %2765 = vmatprep.mubr.bf16.mxu0 %v2407
    %2766 = vmatmul.mubr.bf16.gmra.mrb[0].mxu0 %v2406
    %v2767 = vpop.f32.mrb[0].mxu0
    %v2768 = vadd.f32 %v2539, %v2767
    %v2769 = vpop.f32.mrb[0].mxu0
    %v2770 = vpop.f32.mrb[0].mxu0
    %v2771 = vadd.f32 %v2539, %v2770
    %v2772 = vpop.f32.mrb[0].mxu0
    %2773 = vmatprep.mubr.bf16.mxu0 %v2411
    %2774 = vmatmul.mubr.bf16.gmra.mrb[0].mxu0 %v2410
    %v2775 = vpop.f32.mrb[0].mxu0
    %v2776 = vadd.f32 %v2539, %v2775
    %v2777 = vpop.f32.mrb[0].mxu0
    %v2778 = vpop.f32.mrb[0].mxu0
    %v2779 = vadd.f32 %v2539, %v2778
    %v2780 = vpop.f32.mrb[0].mxu0
    %2781 = vmatprep.mubr.bf16.mxu0 %v2415
    %2782 = vmatmul.mubr.bf16.gmra.mrb[0].mxu0 %v2414
    %v2783 = vpop.f32.mrb[0].mxu0
    %v2784 = vadd.f32 %v2539, %v2783
    %v2785 = vpop.f32.mrb[0].mxu0
    %v2786 = vpop.f32.mrb[0].mxu0
    %v2787 = vadd.f32 %v2539, %v2786
    %v2788 = vpop.f32.mrb[0].mxu0
    %2789 = vmatprep.mubr.bf16.mxu0 %v2419
    %2790 = vmatmul.mubr.bf16.gmra.mrb[0].mxu0 %v2418
    %v2791 = vpop.f32.mrb[0].mxu0
    %v2792 = vadd.f32 %v2539, %v2791
    %v2793 = vpop.f32.mrb[0].mxu0
    %v2794 = vpop.f32.mrb[0].mxu0
    %v2795 = vadd.f32 %v2539, %v2794
    %v2796 = vpop.f32.mrb[0].mxu0
    %2797 = vmatprep.mubr.bf16.mxu0 %v2423
    %2798 = vmatmul.mubr.bf16.gmra.mrb[0].mxu0 %v2422
    %v2799 = vpop.f32.mrb[0].mxu0
    %v2800 = vadd.f32 %v2539, %v2799
    %v2801 = vpop.f32.mrb[0].mxu0
    %v2802 = vpop.f32.mrb[0].mxu0
    %v2803 = vadd.f32 %v2539, %v2802
    %v2804 = vpop.f32.mrb[0].mxu0
    %2805 = vmatprep.mubr.bf16.mxu0 %v2427
    %2806 = vmatmul.mubr.bf16.gmra.mrb[0].mxu0 %v2426
    %v2807 = vpop.f32.mrb[0].mxu0
    %v2808 = vadd.f32 %v2539, %v2807
    %v2809 = vpop.f32.mrb[0].mxu0
    %v2810 = vpop.f32.mrb[0].mxu0
    %v2811 = vadd.f32 %v2539, %v2810
    %v2812 = vpop.f32.mrb[0].mxu0
    %2813 = vmatprep.mubr.bf16.mxu0 %v2431
    %2814 = vmatmul.mubr.bf16.gmra.mrb[0].mxu0 %v2430
    %v2815 = vpop.f32.mrb[0].mxu0
    %v2816 = vadd.f32 %v2539, %v2815
    %v2817 = vpop.f32.mrb[0].mxu0
    %v2818 = vpop.f32.mrb[0].mxu0
    %v2819 = vadd.f32 %v2539, %v2818
    %v2820 = vpop.f32.mrb[0].mxu0
    %2821 = vmatprep.mubr.bf16.mxu0 %v2435
    %2822 = vmatmul.mubr.bf16.gmra.mrb[0].mxu0 %v2434
    %v2823 = vpop.f32.mrb[0].mxu0
    %v2824 = vadd.f32 %v2539, %v2823
    %v2825 = vpop.f32.mrb[0].mxu0
    %v2826 = vpop.f32.mrb[0].mxu0
    %v2827 = vadd.f32 %v2539, %v2826
    %v2828 = vpop.f32.mrb[0].mxu0
    %2829 = vmatprep.mubr.bf16.mxu0 %v2439
    %2830 = vmatmul.mubr.bf16.gmra.mrb[0].mxu0 %v2438
    %v2831 = vpop.f32.mrb[0].mxu0
    %v2832 = vadd.f32 %v2539, %v2831
    %v2833 = vpop.f32.mrb[0].mxu0
    %v2834 = vpop.f32.mrb[0].mxu0
    %v2835 = vadd.f32 %v2539, %v2834
    %v2836 = vpop.f32.mrb[0].mxu0
    %2837 = vmatprep.mubr.bf16.mxu0 %v2443
    %2838 = vmatmul.mubr.bf16.gmra.mrb[0].mxu0 %v2442
    %v2839 = vpop.f32.mrb[0].mxu0
    %v2840 = vadd.f32 %v2539, %v2839
    %v2841 = vpop.f32.mrb[0].mxu0
    %v2842 = vpop.f32.mrb[0].mxu0
    %v2843 = vadd.f32 %v2539, %v2842
    %v2844 = vpop.f32.mrb[0].mxu0
    %2845 = vmatprep.mubr.bf16.mxu0 %v2447
    %2846 = vmatmul.mubr.bf16.gmra.mrb[0].mxu0 %v2446
    %v2847 = vpop.f32.mrb[0].mxu0
    %v2848 = vadd.f32 %v2539, %v2847
    %v2849 = vpop.f32.mrb[0].mxu0
    %v2850 = vpop.f32.mrb[0].mxu0
    %v2851 = vadd.f32 %v2539, %v2850
    %v2852 = vpop.f32.mrb[0].mxu0
    %2853 = vmatprep.mubr.bf16.mxu0 %v2451
    %2854 = vmatmul.mubr.bf16.gmra.mrb[0].mxu0 %v2450
    %v2855 = vpop.f32.mrb[0].mxu0
    %v2856 = vadd.f32 %v2539, %v2855
    %v2857 = vpop.f32.mrb[0].mxu0
    %v2858 = vpop.f32.mrb[0].mxu0
    %v2859 = vadd.f32 %v2539, %v2858
    %v2860 = vpop.f32.mrb[0].mxu0
    %2861 = vmatprep.mubr.bf16.mxu0 %v2455
    %2862 = vmatmul.mubr.bf16.gmra.mrb[0].mxu0 %v2454
    %v2863 = vpop.f32.mrb[0].mxu0
    %v2864 = vadd.f32 %v2539, %v2863
    %v2865 = vpop.f32.mrb[0].mxu0
    %v2866 = vpop.f32.mrb[0].mxu0
    %v2867 = vadd.f32 %v2539, %v2866
    %v2868 = vpop.f32.mrb[0].mxu0
    %2869 = vmatprep.mubr.bf16.mxu0 %v2459
    %2870 = vmatmul.mubr.bf16.gmra.mrb[0].mxu0 %v2458
    %v2871 = vpop.f32.mrb[0].mxu0
    %v2872 = vadd.f32 %v2539, %v2871
    %v2873 = vpop.f32.mrb[0].mxu0
    %v2874 = vpop.f32.mrb[0].mxu0
    %v2875 = vadd.f32 %v2539, %v2874
    %v2876 = vpop.f32.mrb[0].mxu0
    %2877 = vmatprep.mubr.bf16.mxu0 %v2463
    %2878 = vmatmul.mubr.bf16.gmra.mrb[0].mxu0 %v2462
    %v2879 = vpop.f32.mrb[0].mxu0
    %v2880 = vadd.f32 %v2539, %v2879
    %v2881 = vpop.f32.mrb[0].mxu0
    %v2882 = vpop.f32.mrb[0].mxu0
    %v2883 = vadd.f32 %v2539, %v2882
    %v2884 = vpop.f32.mrb[0].mxu0
    %2885 = vmatprep.mubr.bf16.mxu0 %v2467
    %2886 = vmatmul.mubr.bf16.gmra.mrb[0].mxu0 %v2466
    %v2887 = vpop.f32.mrb[0].mxu0
    %v2888 = vadd.f32 %v2539, %v2887
    %v2889 = vpop.f32.mrb[0].mxu0
    %v2890 = vpop.f32.mrb[0].mxu0
    %v2891 = vadd.f32 %v2539, %v2890
    %v2892 = vpop.f32.mrb[0].mxu0
    %2893 = vdwg.mxu0
    %2894 = vmatprep.subr.bf16.mxu0 0
    %2895 = vmatpush1.bf16.msra.mxu0 %v2685
    %2896 = vmatprep.subr.bf16.mxu0 0
    %2897 = vmatpush1.bf16.msra.mxu0 %v2686
    %2898 = vmatprep.subr.bf16.mxu0 0
    %2899 = vmatpush1.bf16.msra.mxu0 %v2687
    %2900 = vmatprep.subr.bf16.mxu0 0
    %2901 = vmatpush1.bf16.msra.mxu0 %v2688
    %2902 = vmatprep.subr.bf16.mxu0 0
    %2903 = vmatpush1.bf16.msra.mxu0 %v2689
    %2904 = vmatprep.subr.bf16.mxu0 0
    %2905 = vmatpush1.bf16.msra.mxu0 %v2690
    %2906 = vmatprep.subr.bf16.mxu0 0
    %2907 = vmatpush1.bf16.msra.mxu0 %v2691
    %2908 = vmatprep.subr.bf16.mxu0 0
    %2909 = vmatpush1.bf16.msra.mxu0 %v2692
    %2910 = vmatprep.subr.bf16.mxu0 0
    %2911 = vmatpush1.bf16.msra.mxu0 %v2693
    %2912 = vmatprep.subr.bf16.mxu0 0
    %2913 = vmatpush1.bf16.msra.mxu0 %v2694
    %2914 = vmatprep.subr.bf16.mxu0 0
    %2915 = vmatpush1.bf16.msra.mxu0 %v2695
    %2916 = vmatprep.subr.bf16.mxu0 0
    %2917 = vmatpush1.bf16.msra.mxu0 %v2696
    %2918 = vmatprep.subr.bf16.mxu0 0
    %2919 = vmatpush1.bf16.msra.mxu0 %v2697
    %2920 = vmatprep.subr.bf16.mxu0 0
    %2921 = vmatpush1.bf16.msra.mxu0 %v2698
    %2922 = vmatprep.subr.bf16.mxu0 0
    %2923 = vmatpush1.bf16.msra.mxu0 %v2699
    %2924 = vmatprep.subr.bf16.mxu0 0
    %2925 = vmatpush1.bf16.msra.mxu0 %v2700
    %2926 = vmatprep.mubr.bf16.mxu0 %v2409
    %2927 = vmatmul.mubr.bf16.gmra.mrb[0].mxu0 %v2408
    %v2928 = vpop.f32.mrb[0].mxu0
    %v2929 = vadd.f32 %v2768, %v2928
    %v2930 = vpop.f32.mrb[0].mxu0
    %v2931 = vpop.f32.mrb[0].mxu0
    %v2932 = vadd.f32 %v2771, %v2931
    %v2933 = vpop.f32.mrb[0].mxu0
    %2934 = vmatprep.mubr.bf16.mxu0 %v2413
    %2935 = vmatmul.mubr.bf16.gmra.mrb[0].mxu0 %v2412
    %v2936 = vpop.f32.mrb[0].mxu0
    %v2937 = vadd.f32 %v2776, %v2936
    %v2938 = vpop.f32.mrb[0].mxu0
    %v2939 = vpop.f32.mrb[0].mxu0
    %v2940 = vadd.f32 %v2779, %v2939
    %v2941 = vpop.f32.mrb[0].mxu0
    %2942 = vmatprep.mubr.bf16.mxu0 %v2417
    %2943 = vmatmul.mubr.bf16.gmra.mrb[0].mxu0 %v2416
    %v2944 = vpop.f32.mrb[0].mxu0
    %v2945 = vadd.f32 %v2784, %v2944
    %v2946 = vpop.f32.mrb[0].mxu0
    %v2947 = vpop.f32.mrb[0].mxu0
    %v2948 = vadd.f32 %v2787, %v2947
    %v2949 = vpop.f32.mrb[0].mxu0
    %2950 = vmatprep.mubr.bf16.mxu0 %v2421
    %2951 = vmatmul.mubr.bf16.gmra.mrb[0].mxu0 %v2420
    %v2952 = vpop.f32.mrb[0].mxu0
    %v2953 = vadd.f32 %v2792, %v2952
    %v2954 = vpop.f32.mrb[0].mxu0
    %v2955 = vpop.f32.mrb[0].mxu0
    %v2956 = vadd.f32 %v2795, %v2955
    %v2957 = vpop.f32.mrb[0].mxu0
    %2958 = vmatprep.mubr.bf16.mxu0 %v2425
    %2959 = vmatmul.mubr.bf16.gmra.mrb[0].mxu0 %v2424
    %v2960 = vpop.f32.mrb[0].mxu0
    %v2961 = vadd.f32 %v2800, %v2960
    %v2962 = vpop.f32.mrb[0].mxu0
    %v2963 = vpop.f32.mrb[0].mxu0
    %v2964 = vadd.f32 %v2803, %v2963
    %v2965 = vpop.f32.mrb[0].mxu0
    %2966 = vmatprep.mubr.bf16.mxu0 %v2429
    %2967 = vmatmul.mubr.bf16.gmra.mrb[0].mxu0 %v2428
    %v2968 = vpop.f32.mrb[0].mxu0
    %v2969 = vadd.f32 %v2808, %v2968
    %v2970 = vpop.f32.mrb[0].mxu0
    %v2971 = vpop.f32.mrb[0].mxu0
    %v2972 = vadd.f32 %v2811, %v2971
    %v2973 = vpop.f32.mrb[0].mxu0
    %2974 = vmatprep.mubr.bf16.mxu0 %v2433
    %2975 = vmatmul.mubr.bf16.gmra.mrb[0].mxu0 %v2432
    %v2976 = vpop.f32.mrb[0].mxu0
    %v2977 = vadd.f32 %v2816, %v2976
    %v2978 = vpop.f32.mrb[0].mxu0
    %v2979 = vpop.f32.mrb[0].mxu0
    %v2980 = vadd.f32 %v2819, %v2979
    %v2981 = vpop.f32.mrb[0].mxu0
    %2982 = vmatprep.mubr.bf16.mxu0 %v2437
    %2983 = vmatmul.mubr.bf16.gmra.mrb[0].mxu0 %v2436
    %v2984 = vpop.f32.mrb[0].mxu0
    %v2985 = vadd.f32 %v2824, %v2984
    %v2986 = vpop.f32.mrb[0].mxu0
    %v2987 = vpop.f32.mrb[0].mxu0
    %v2988 = vadd.f32 %v2827, %v2987
    %v2989 = vpop.f32.mrb[0].mxu0
    %2990 = vmatprep.mubr.bf16.mxu0 %v2441
    %2991 = vmatmul.mubr.bf16.gmra.mrb[0].mxu0 %v2440
    %v2992 = vpop.f32.mrb[0].mxu0
    %v2993 = vadd.f32 %v2832, %v2992
    %v2994 = vpop.f32.mrb[0].mxu0
    %v2995 = vpop.f32.mrb[0].mxu0
    %v2996 = vadd.f32 %v2835, %v2995
    %v2997 = vpop.f32.mrb[0].mxu0
    %2998 = vmatprep.mubr.bf16.mxu0 %v2445
    %2999 = vmatmul.mubr.bf16.gmra.mrb[0].mxu0 %v2444
    %v3000 = vpop.f32.mrb[0].mxu0
    %v3001 = vadd.f32 %v2840, %v3000
    %v3002 = vpop.f32.mrb[0].mxu0
    %v3003 = vpop.f32.mrb[0].mxu0
    %v3004 = vadd.f32 %v2843, %v3003
    %v3005 = vpop.f32.mrb[0].mxu0
    %3006 = vmatprep.mubr.bf16.mxu0 %v2449
    %3007 = vmatmul.mubr.bf16.gmra.mrb[0].mxu0 %v2448
    %v3008 = vpop.f32.mrb[0].mxu0
    %v3009 = vadd.f32 %v2848, %v3008
    %v3010 = vpop.f32.mrb[0].mxu0
    %v3011 = vpop.f32.mrb[0].mxu0
    %v3012 = vadd.f32 %v2851, %v3011
    %v3013 = vpop.f32.mrb[0].mxu0
    %3014 = vmatprep.mubr.bf16.mxu0 %v2453
    %3015 = vmatmul.mubr.bf16.gmra.mrb[0].mxu0 %v2452
    %v3016 = vpop.f32.mrb[0].mxu0
    %v3017 = vadd.f32 %v2856, %v3016
    %v3018 = vpop.f32.mrb[0].mxu0
    %v3019 = vpop.f32.mrb[0].mxu0
    %v3020 = vadd.f32 %v2859, %v3019
    %v3021 = vpop.f32.mrb[0].mxu0
    %3022 = vmatprep.mubr.bf16.mxu0 %v2457
    %3023 = vmatmul.mubr.bf16.gmra.mrb[0].mxu0 %v2456
    %v3024 = vpop.f32.mrb[0].mxu0
    %v3025 = vadd.f32 %v2864, %v3024
    %v3026 = vpop.f32.mrb[0].mxu0
    %v3027 = vpop.f32.mrb[0].mxu0
    %v3028 = vadd.f32 %v2867, %v3027
    %v3029 = vpop.f32.mrb[0].mxu0
    %3030 = vmatprep.mubr.bf16.mxu0 %v2461
    %3031 = vmatmul.mubr.bf16.gmra.mrb[0].mxu0 %v2460
    %v3032 = vpop.f32.mrb[0].mxu0
    %v3033 = vadd.f32 %v2872, %v3032
    %v3034 = vpop.f32.mrb[0].mxu0
    %v3035 = vpop.f32.mrb[0].mxu0
    %v3036 = vadd.f32 %v2875, %v3035
    %v3037 = vpop.f32.mrb[0].mxu0
    %3038 = vmatprep.mubr.bf16.mxu0 %v2465
    %3039 = vmatmul.mubr.bf16.gmra.mrb[0].mxu0 %v2464
    %v3040 = vpop.f32.mrb[0].mxu0
    %v3041 = vadd.f32 %v2880, %v3040
    %v3042 = vpop.f32.mrb[0].mxu0
    %v3043 = vpop.f32.mrb[0].mxu0
    %v3044 = vadd.f32 %v2883, %v3043
    %v3045 = vpop.f32.mrb[0].mxu0
    %3046 = vmatprep.mubr.bf16.mxu0 %v2469
    %3047 = vmatmul.mubr.bf16.gmra.mrb[0].mxu0 %v2468
    %v3048 = vpop.f32.mrb[0].mxu0
    %v3049 = vadd.f32 %v2888, %v3048
    %v3050 = vpop.f32.mrb[0].mxu0
    %v3051 = vpop.f32.mrb[0].mxu0
    %v3052 = vadd.f32 %v2891, %v3051
    %v3053 = vpop.f32.mrb[0].mxu0
    %3054 = vdwg.mxu0
    %v3055 = vpack.c.bf16 %v2932, %v2929
    %v3056 = vpack.c.bf16 %v2940, %v2937
    %v3057 = vpack.c.bf16 %v2948, %v2945
    %v3058 = vpack.c.bf16 %v2956, %v2953
    %v3059 = vpack.c.bf16 %v2964, %v2961
    %v3060 = vpack.c.bf16 %v2972, %v2969
    %v3061 = vpack.c.bf16 %v2980, %v2977
    %v3062 = vpack.c.bf16 %v2988, %v2985
    %v3063 = vpack.c.bf16 %v2996, %v2993
    %v3064 = vpack.c.bf16 %v3004, %v3001
    %v3065 = vpack.c.bf16 %v3012, %v3009
    %v3066 = vpack.c.bf16 %v3020, %v3017
    %v3067 = vpack.c.bf16 %v3028, %v3025
    %v3068 = vpack.c.bf16 %v3036, %v3033
    %v3069 = vpack.c.bf16 %v3044, %v3041
    %v3070 = vpack.c.bf16 %v3052, %v3049
    %v3087 = vunpack.c.l.b16 %v3055
    %v3088 = vunpack.c.h.b16 %v3055
    %v3089 = vunpack.c.l.b16 %v3056
    %v3090 = vunpack.c.h.b16 %v3056
    %v3091 = vunpack.c.l.b16 %v3057
    %v3092 = vunpack.c.h.b16 %v3057
    %v3093 = vunpack.c.l.b16 %v3058
    %v3094 = vunpack.c.h.b16 %v3058
    %v3095 = vunpack.c.l.b16 %v3059
    %v3096 = vunpack.c.h.b16 %v3059
    %v3097 = vunpack.c.l.b16 %v3060
    %v3098 = vunpack.c.h.b16 %v3060
    %v3099 = vunpack.c.l.b16 %v3061
    %v3100 = vunpack.c.h.b16 %v3061
    %v3101 = vunpack.c.l.b16 %v3062
    %v3102 = vunpack.c.h.b16 %v3062
    %v3103 = vunpack.c.l.b16 %v3063
    %v3104 = vunpack.c.h.b16 %v3063
    %v3105 = vunpack.c.l.b16 %v3064
    %v3106 = vunpack.c.h.b16 %v3064
    %v3107 = vunpack.c.l.b16 %v3065
    %v3108 = vunpack.c.h.b16 %v3065
    %v3109 = vunpack.c.l.b16 %v3066
    %v3110 = vunpack.c.h.b16 %v3066
    %v3111 = vunpack.c.l.b16 %v3067
    %v3112 = vunpack.c.h.b16 %v3067
    %v3113 = vunpack.c.l.b16 %v3068
    %v3114 = vunpack.c.h.b16 %v3068
    %v3115 = vunpack.c.l.b16 %v3069
    %v3116 = vunpack.c.h.b16 %v3069
    %v3117 = vunpack.c.l.b16 %v3070
    %v3118 = vunpack.c.h.b16 %v3070
    %v3119 = vpack.c.b16 %v3087, %v3087
    %v3120 = vpack.c.b16 %v3088, %v3088
    %v3121 = vpack.c.b16 %v3089, %v3089
    %v3122 = vpack.c.b16 %v3090, %v3090
    %v3123 = vpack.c.b16 %v3091, %v3091
    %v3124 = vpack.c.b16 %v3092, %v3092
    %v3125 = vpack.c.b16 %v3093, %v3093
    %v3126 = vpack.c.b16 %v3094, %v3094
    %v3127 = vpack.c.b16 %v3095, %v3095
    %v3128 = vpack.c.b16 %v3096, %v3096
    %v3129 = vpack.c.b16 %v3097, %v3097
    %v3130 = vpack.c.b16 %v3098, %v3098
    %v3131 = vpack.c.b16 %v3099, %v3099
    %v3132 = vpack.c.b16 %v3100, %v3100
    %v3133 = vpack.c.b16 %v3101, %v3101
    %v3134 = vpack.c.b16 %v3102, %v3102
    %v3135 = vpack.c.b16 %v3103, %v3103
    %v3136 = vpack.c.b16 %v3104, %v3104
    %v3137 = vpack.c.b16 %v3105, %v3105
    %v3138 = vpack.c.b16 %v3106, %v3106
    %v3139 = vpack.c.b16 %v3107, %v3107
    %v3140 = vpack.c.b16 %v3108, %v3108
    %v3141 = vpack.c.b16 %v3109, %v3109
    %v3142 = vpack.c.b16 %v3110, %v3110
    %v3143 = vpack.c.b16 %v3111, %v3111
    %v3144 = vpack.c.b16 %v3112, %v3112
    %v3145 = vpack.c.b16 %v3113, %v3113
    %v3146 = vpack.c.b16 %v3114, %v3114
    %v3147 = vpack.c.b16 %v3115, %v3115
    %v3148 = vpack.c.b16 %v3116, %v3116
    %v3149 = vpack.c.b16 %v3117, %v3117
    %v3150 = vpack.c.b16 %v3118, %v3118
    %3183 = vst [vmem:[%s7] sm:$0xf] %v3119
    %3184 = vst [vmem:[%s7 + $0x4] sm:$0xf] %v3120
    %3185 = vst [vmem:[%s7 + $0x8] sm:$0xf] %v3121
    %3186 = vst [vmem:[%s7 + $0xc] sm:$0xf] %v3122
    %3187 = vst [vmem:[%s7 + $0x10] sm:$0xf] %v3123
    %3188 = vst [vmem:[%s7 + $0x14] sm:$0xf] %v3124
    %3189 = vst [vmem:[%s7 + $0x18] sm:$0xf] %v3125
    %3190 = vst [vmem:[%s7 + $0x1c] sm:$0xf] %v3126
    %3191 = vst [vmem:[%s7 + $0x20] sm:$0xf] %v3127
    %3192 = vst [vmem:[%s7 + $0x24] sm:$0xf] %v3128
    %3193 = vst [vmem:[%s7 + $0x28] sm:$0xf] %v3129
    %3194 = vst [vmem:[%s7 + $0x2c] sm:$0xf] %v3130
    %3195 = vst [vmem:[%s7 + $0x30] sm:$0xf] %v3131
    %3196 = vst [vmem:[%s7 + $0x34] sm:$0xf] %v3132
    %3197 = vst [vmem:[%s7 + $0x38] sm:$0xf] %v3133
    %3198 = vst [vmem:[%s7 + $0x3c] sm:$0xf] %v3134
    %3199 = vst [vmem:[%s7 + $0x40] sm:$0xf] %v3135
    %3200 = vst [vmem:[%s7 + $0x44] sm:$0xf] %v3136
    %3201 = vst [vmem:[%s7 + $0x48] sm:$0xf] %v3137
    %3202 = vst [vmem:[%s7 + $0x4c] sm:$0xf] %v3138
    %3203 = vst [vmem:[%s7 + $0x50] sm:$0xf] %v3139
    %3204 = vst [vmem:[%s7 + $0x54] sm:$0xf] %v3140
    %3205 = vst [vmem:[%s7 + $0x58] sm:$0xf] %v3141
    %3206 = vst [vmem:[%s7 + $0x5c] sm:$0xf] %v3142
    %3207 = vst [vmem:[%s7 + $0x60] sm:$0xf] %v3143
    %3208 = vst [vmem:[%s7 + $0x64] sm:$0xf] %v3144
    %3209 = vst [vmem:[%s7 + $0x68] sm:$0xf] %v3145
    %3210 = vst [vmem:[%s7 + $0x6c] sm:$0xf] %v3146
    %3211 = vst [vmem:[%s7 + $0x70] sm:$0xf] %v3147
    %3212 = vst [vmem:[%s7 + $0x74] sm:$0xf] %v3148
    %3213 = vst [vmem:[%s7 + $0x78] sm:$0xf] %v3149
    %3214 = vst [vmem:[%s7 + $0x7c] sm:$0xf] %v3150
    // Predicated region
    $region38: #{_forward_scalar_t.1} parent=1 // pred_check
      _
    $region39: #{_forward_scalar_t.1} parent=1 // pred_check_branch
      %3216 = sbr.rel (0) target = $region41
    $region40: #{_forward_scalar_t.1} parent=1 // pred_region
      _
    $region41: #{_forward_scalar_t.1} parent=1 // pred_fallthru
      _
    // Predicated region
    $region42: #{_forward_scalar_t.1} parent=1 // pred_check
      _
    $region43: #{_forward_scalar_t.1} parent=1 // pred_check_branch
      %3218 = sbr.rel (0) target = $region45
    $region44: #{_forward_scalar_t.1} parent=1 // pred_region
      _
    $region45: #{_forward_scalar_t.1} parent=1 // pred_fallthru
      _
    %3219 = vsyncpa [#allocation3], 1
    %3220 = vsyncpa [#allocation5], 1

</llo_original>
